<compile_context>
chip_gen: v7x
topology: tpu7x:2x2x1
jax: 0.10.0
libtpu: 0.0.40
codegen_flags: <defaults>
</compile_context>

<pallas_src>
import numpy as np
import jax
import jax.numpy as jnp
from jax.experimental import pallas as pl
from jax.experimental.pallas import tpu as pltpu


# ----------------------------------------------------------------------------
# Glue: bilinear resize with PyTorch F.interpolate(mode='bilinear',
# align_corners=False) semantics (half-pixel centers, no anti-aliasing).
# ----------------------------------------------------------------------------
def _interp_1d(in_size, out_size):
    i = jnp.arange(out_size, dtype=jnp.float32)
    scale = in_size / out_size
    src = (i + 0.5) * scale - 0.5
    src = jnp.maximum(src, 0.0)
    i0 = jnp.floor(src).astype(jnp.int32)
    i0 = jnp.minimum(i0, in_size - 1)
    i1 = jnp.minimum(i0 + 1, in_size - 1)
    w1 = src - i0.astype(jnp.float32)
    w0 = 1.0 - w1
    return i0, i1, w0, w1


def bilinear_resize_nchw(x, out_h, out_w):
    # x: (B, C, H, W) float32
    _, _, H, W = x.shape
    h0, h1, wh0, wh1 = _interp_1d(H, out_h)
    v0, v1, wv0, wv1 = _interp_1d(W, out_w)
    xr = (x[:, :, h0, :] * wh0[None, None, :, None]
          + x[:, :, h1, :] * wh1[None, None, :, None])            # (B, C, out_h, W)
    out = (xr[:, :, :, v0] * wv0[None, None, None, :]
           + xr[:, :, :, v1] * wv1[None, None, None, :])          # (B, C, out_h, out_w)
    return out


# ----------------------------------------------------------------------------
# Pallas kernel: one (batch, query-tile) per grid step.
#   que_ref  : (1, TQ, C)   query features, channel-minor (pre-transposed)
#   sup_ref  : (1, C, Np)   support features, channel-major (padded N)
#   mask_ref : (1, 1, Np)   resized, flattened, padded support GT mask
#   r_ref    : (1, TQ, Np)  R_qs tile (cosine similarity)
#   att_ref  : (1, TQ, 1)   un-normalized attention column for this tile
#   sup_s_ref: (C, Np) bf16 per-batch normalized support (scratch)
#   g_ref    : (C, 1)  f32  per-batch g = sup_s @ gene^T (scratch)
# ----------------------------------------------------------------------------
def transformer_kernel(que_ref, sup_ref, mask_ref, r_ref, att_ref,
                       sup_s_ref, g_ref):
    # --- per-batch support-side work, hoisted out of the query-tile loop ----
    @pl.when(pl.program_id(1) == 0)
    def _():
        sup = sup_ref[0]                                            # (C, Np)
        mask = mask_ref[0]                                          # (1, Np)
        # Fold the L2 channel-norm division into the operand (EUP rsqrt).
        # Note: eps moves off the norm product vs the reference; only matters
        # for ~zero-norm feature columns, far below the test tolerance.
        sup_s = sup * jax.lax.rsqrt(
            jnp.sum(sup * sup, axis=0, keepdims=True) + 1e-12)      # (C, Np)
        sup_s_ref[...] = sup_s.astype(jnp.bfloat16)
        # inverse_trans: mask @ mask^T is (1,1) -> gene = mask / (sum + eps).
        gene = mask / (jnp.sum(mask * mask) + 1e-5)                 # (1, Np)
        # g = sup_s @ gene^T (query-invariant).  Elementwise mul + lane reduce
        # (VPU + XLU, once per batch) avoids a transposed MXU contraction.
        g_ref[...] = jnp.sum(sup_s * gene, axis=1, keepdims=True)   # (C, 1)

    # --- per query tile ------------------------------------------------------
    que = que_ref[0]                                                # (TQ, C)
    que_s = que * jax.lax.rsqrt(
        jnp.sum(que * que, axis=1, keepdims=True) + 1e-12)          # (TQ, C)

    # Cosine similarity on the MXU: bf16 operands, f32 accumulation.
    r = jnp.dot(que_s.astype(jnp.bfloat16), sup_s_ref[...],
                preferred_element_type=jnp.float32)                 # (TQ, Np)
    r_ref[0] = r.astype(r_ref.dtype)

    # Attention via the factorization att = que_s @ (sup_s @ gene^T).
    att_ref[0] = jnp.dot(que_s, g_ref[...],
                         preferred_element_type=jnp.float32)        # (TQ, 1)


# ----------------------------------------------------------------------------
# Generation-aware tiling / VMEM budgeting.
# ----------------------------------------------------------------------------
def _vmem_capacity_bytes():
    try:
        info = pltpu.get_tpu_info()
        cap = getattr(info, "vmem_capacity_bytes", None)
        if cap:
            return int(cap)
    except Exception:
        pass
    return 64 * 1024 * 1024        # conservative default (v7x per-TC VMEM)


def _budgets(C, Np):
    """R-tile budget + scoped vmem limit (v5e/v6e: 128 MiB phys; v7x: 64 MiB/TC)."""
    cap = _vmem_capacity_bytes()
    if cap >= 96 * 1024 * 1024:            # v5e / v6e: plenty of VMEM, go big
        vmem_limit = 64 * 1024 * 1024
        r_budget = 28 * 1024 * 1024
    else:                                   # v7x (or unknown): tight budgets
        vmem_limit = 48 * 1024 * 1024
        r_budget = 10 * 1024 * 1024
    # Resident support-side footprint: double-buffered f32 support input block,
    # bf16 normalized-support scratch, g vector, mask block (+ slack).
    c_lanes = max(C, 8)
    resident = 2 * c_lanes * Np * 4 + c_lanes * Np * 2 + 2 * Np * 4 + 4096
    # TODO(synk): if the resident support block alone threatens the v7x budget
    # (very large C*Np), add a key-tile grid axis over N instead.
    r_budget = max(2 * 1024 * 1024,
                   min(r_budget, vmem_limit - resident - (4 << 20)))
    return r_budget, vmem_limit


def _pick_query_tile(Np, C, r_budget_bytes):
    """Largest TQ that divides Np, is 128-aligned and fits the budget."""
    c_lanes = ((max(C, 1) + 127) // 128) * 128   # que lane dim pads to >=128
    tq = Np
    while tq >= 128:
        if Np % tq == 0 and tq % 128 == 0:
            r_bytes = 2 * tq * Np * 4            # double-buffered f32 R block
            que_bytes = 2 * tq * c_lanes * 4
            att_bytes = 2 * tq * 128 * 4
            if r_bytes + que_bytes + att_bytes <= r_budget_bytes:
                return tq
        tq -= 128
    return 128


# ----------------------------------------------------------------------------
# Forward wrapper.
# ----------------------------------------------------------------------------
def transformer_forward(x_sup, x_que, x_sup_gt, r_dtype=jnp.float32):
    """Pallas implementation of Transformer.forward.

    x_sup   : (B, C, f, f)   NCHW support features
    x_que   : (B, C, f, f)   NCHW query features
    x_sup_gt: (B, 1, Hg, Wg) NCHW support ground-truth mask
    returns (x_att (B, 1, f, f), R_qs (B, N, N)) with N = f*f
    r_dtype : dtype of R_qs (keep float32 to match the PyTorch module; bf16 is
              within ~0.4% if downstream permits).
    """
    B, C, f, _ = x_sup.shape
    N = f * f
    Np = ((N + 127) // 128) * 128          # lane-align the flattened spatial dim
    pad = Np - N

    r_budget, vmem_limit = _budgets(C, Np)
    TQ = _pick_query_tile(Np, C, r_budget)
    n_qt = Np // TQ

    sup = x_sup.reshape(B, C, N).astype(jnp.float32)                     # (B, C, N)
    que_t = jnp.transpose(x_que.reshape(B, C, N).astype(jnp.float32),
                          (0, 2, 1))                                     # (B, N, C)
    mask = bilinear_resize_nchw(x_sup_gt.astype(jnp.float32), f, f
                                ).reshape(B, 1, N)                       # (B, 1, N)
    if pad:
        # Zero-padded columns get zero norm -> zero cosine; padded query rows
        # and mask entries contribute nothing.  Sliced off below.
        sup = jnp.pad(sup, ((0, 0), (0, 0), (0, pad)))
        que_t = jnp.pad(que_t, ((0, 0), (0, pad), (0, 0)))
        mask = jnp.pad(mask, ((0, 0), (0, 0), (0, pad)))

    cost = pl.CostEstimate(
        flops=2 * B * Np * Np * C + 2 * B * Np * C,
        transcendentals=2 * B * Np,
        bytes_accessed=B * (Np * Np * np.dtype(r_dtype).itemsize
                            + 2 * C * Np * 4 + 2 * Np * 4))

    r_qs, att = pl.pallas_call(
        transformer_kernel,
        out_shape=(jax.ShapeDtypeStruct((B, Np, Np), r_dtype),
                   jax.ShapeDtypeStruct((B, Np, 1), jnp.float32)),
        grid_spec=pltpu.PrefetchScalarGridSpec(
            num_scalar_prefetch=0,
            grid=(B, n_qt),
            in_specs=[
                pl.BlockSpec((1, TQ, C), lambda b, q: (b, q, 0)),    # query tile
                pl.BlockSpec((1, C, Np), lambda b, q: (b, 0, 0)),    # full support
                pl.BlockSpec((1, 1, Np), lambda b, q: (b, 0, 0)),    # full mask
            ],
            out_specs=(
                pl.BlockSpec((1, TQ, Np), lambda b, q: (b, q, 0)),   # R_qs tile
                pl.BlockSpec((1, TQ, 1), lambda b, q: (b, q, 0)),    # att column
            ),
            scratch_shapes=[
                pltpu.VMEM((C, Np), jnp.bfloat16),   # per-batch normalized support
                pltpu.VMEM((C, 1), jnp.float32),     # per-batch g = sup_s @ gene^T
            ]),
        compiler_params=pltpu.CompilerParams(
            dimension_semantics=("parallel", "arbitrary"),
            vmem_limit_bytes=vmem_limit),
        cost_estimate=cost,
    )(que_t, sup, mask)

    r_qs = r_qs[:, :N, :N]
    att_row = att[:, :N, 0][:, None, :]                                  # (B, 1, N)

    # cam_normalize: per-(batch, channel=1) min/max normalization.  Spans all
    # query tiles, so it stays O(B*N) glue in plain JAX.
    a_min = jnp.min(att_row, axis=2, keepdims=True)
    a_max = jnp.max(att_row, axis=2, keepdims=True)
    att_n = (att_row - a_min) / (a_max - a_min + 1e-5)
    x_att = att_n.reshape(B, 1, f, f)
    return x_att, r_qs


# ----------------------------------------------------------------------------
# Pure-JAX reference (mirrors the PyTorch forward) for a correctness check.
# ----------------------------------------------------------------------------
def transformer_reference(x_sup, x_que, x_sup_gt):
    B, C, f, _ = x_sup.shape
    N = f * f
    mask = bilinear_resize_nchw(x_sup_gt.astype(jnp.float32), f, f).reshape(B, 1, N)
    mask_t = jnp.transpose(mask, (0, 2, 1))                             # (B, N, 1)
    mul = jnp.matmul(mask, mask_t) + 1e-5                               # (B, 1, 1)
    gene_inv = jnp.matmul(mask_t, 1.0 / mul)                            # (B, N, 1)

    sup = x_sup.reshape(B, C, N).astype(jnp.float32)
    que = x_que.reshape(B, C, N).astype(jnp.float32)
    que_norm = jnp.linalg.norm(que, axis=1, keepdims=True)              # (B, 1, N)
    sup_norm = jnp.linalg.norm(sup, axis=1, keepdims=True)              # (B, 1, N)
    qs_norm = jnp.matmul(jnp.transpose(que_norm, (0, 2, 1)), sup_norm)  # (B, N, N)
    qs = jnp.matmul(jnp.transpose(que, (0, 2, 1)), sup)                 # (B, N, N)
    r = qs / (qs_norm + 1e-5)
    att = jnp.matmul(r, gene_inv).reshape(B, 1, f, f)
    a_min = jnp.min(att.reshape(B, 1, -1), axis=2)[:, :, None, None]
    a_max = jnp.max(att.reshape(B, 1, -1), axis=2)[:, :, None, None]
    att_n = (att - a_min) / (a_max - a_min + 1e-5)
    return att_n, r


if __name__ == "__main__":
    key = jax.random.PRNGKey(0)
    k1, k2, k3 = jax.random.split(key, 3)

    B, C, f = 2, 4, 16
    x_sup = jax.random.normal(k1, (B, C, f, f), dtype=jnp.float32)
    x_que = jax.random.normal(k2, (B, C, f, f), dtype=jnp.float32)
    # support GT mask at a different resolution to exercise the bilinear resize
    x_sup_gt = jax.random.uniform(k3, (B, 1, 32, 32), dtype=jnp.float32)

    x_att, r_qs = jax.jit(transformer_forward)(x_sup, x_que, x_sup_gt)
    jax.block_until_ready((x_att, r_qs))

    x_att_ref, r_qs_ref = transformer_reference(x_sup, x_que, x_sup_gt)
    np.testing.assert_allclose(np.asarray(r_qs), np.asarray(r_qs_ref),
                               rtol=1e-2, atol=1e-2)
    np.testing.assert_allclose(np.asarray(x_att), np.asarray(x_att_ref),
                               rtol=1e-2, atol=1e-2)

    print("KERNEL_OK")
</pallas_src>

<mosaic_0001>
module attributes {stable_mosaic.version = 11 : i64} {
  func.func @transformer_kernel(%arg0: i32, %arg1: i32, %arg2: memref<1x256x4xf32, #tpu.memory_space<vmem>>, %arg3: memref<1x4x256xf32, #tpu.memory_space<vmem>>, %arg4: memref<1x1x256xf32, #tpu.memory_space<vmem>>, %arg5: memref<1x256x256xf32, #tpu.memory_space<vmem>>, %arg6: memref<1x256x1xf32, #tpu.memory_space<vmem>>, %arg7: memref<4x256xbf16, #tpu.memory_space<vmem>>, %arg8: memref<4x1xf32, #tpu.memory_space<vmem>>) attributes {dimension_semantics = [#tpu.dimension_semantics<parallel>, #tpu.dimension_semantics<arbitrary>], iteration_bounds = array<i64: 2, 1>, scalar_prefetch = 0 : i64, scratch_operands = 2 : i64, tpu.core_type = #tpu.core_type<tc>, window_params = [{transform_indices = @transform_0, window_bounds = array<i64: 1, 256, 4>}, {transform_indices = @transform_1, window_bounds = array<i64: 1, 4, 256>}, {transform_indices = @transform_2, window_bounds = array<i64: 1, 1, 256>}, {transform_indices = @transform_3, window_bounds = array<i64: 1, 256, 256>}, {transform_indices = @transform_4, window_bounds = array<i64: 1, 256, 1>}]} {
    %c0_i32 = arith.constant 0 : i32
    %0 = arith.cmpi eq, %arg1, %c0_i32 : i32
    %1 = arith.extui %0 : i1 to i32
    %c0_i32_0 = arith.constant 0 : i32
    %2 = arith.cmpi ne, %1, %c0_i32_0 : i32
    scf.if %2 {
      %c0_16 = arith.constant 0 : index
      %c0_17 = arith.constant 0 : index
      %c0_18 = arith.constant 0 : index
      %24 = vector.load %arg3[%c0_16, %c0_17, %c0_18] : memref<1x4x256xf32, #tpu.memory_space<vmem>>, vector<1x4x256xf32>
      %25 = vector.shape_cast %24 : vector<1x4x256xf32> to vector<4x256xf32>
      %c0_19 = arith.constant 0 : index
      %c0_20 = arith.constant 0 : index
      %c0_21 = arith.constant 0 : index
      %26 = vector.load %arg4[%c0_19, %c0_20, %c0_21] : memref<1x1x256xf32, #tpu.memory_space<vmem>>, vector<1x1x256xf32>
      %27 = vector.shape_cast %26 : vector<1x1x256xf32> to vector<1x256xf32>
      %28 = arith.mulf %25, %25 : vector<4x256xf32>
      %cst_22 = arith.constant dense<0.000000e+00> : vector<256xf32>
      %29 = vector.multi_reduction <add>, %28, %cst_22 [0] : vector<4x256xf32> to vector<256xf32>
      %30 = vector.shape_cast %29 : vector<256xf32> to vector<1x256xf32>
      %cst_23 = arith.constant 9.99999996E-13 : f32
      %31 = vector.broadcast %cst_23 : f32 to vector<1x256xf32>
      %32 = arith.addf %30, %31 : vector<1x256xf32>
      %33 = math.rsqrt %32 : vector<1x256xf32>
      %34 = vector.broadcast %33 : vector<1x256xf32> to vector<4x256xf32>
      %35 = arith.mulf %25, %34 : vector<4x256xf32>
      %36 = arith.truncf %35 : vector<4x256xf32> to vector<4x256xbf16>
      %c0_24 = arith.constant 0 : index
      %c0_25 = arith.constant 0 : index
      %37 = vector.load %arg7[%c0_24, %c0_25] : memref<4x256xbf16, #tpu.memory_space<vmem>>, vector<4x256xbf16>
      tpu.vector_store %arg7[%c0_24, %c0_25], %36 {strides = array<i32>} : memref<4x256xbf16, #tpu.memory_space<vmem>>, vector<4x256xbf16>,
      %38 = arith.mulf %27, %27 : vector<1x256xf32>
      %39 = vector.shape_cast %38 : vector<1x256xf32> to vector<1x1x256xf32>
      %cst_26 = arith.constant dense<0.000000e+00> : vector<1xf32>
      %40 = vector.multi_reduction <add>, %39, %cst_26 [1, 2] : vector<1x1x256xf32> to vector<1xf32>
      %41 = vector.shape_cast %40 : vector<1xf32> to vector<1x1x1xf32>
      %42 = vector.extract %41[0, 0, 0] : f32 from vector<1x1x1xf32>
      %cst_27 = arith.constant 9.99999974E-6 : f32
      %43 = arith.addf %42, %cst_27 : f32
      %44 = vector.broadcast %43 : f32 to vector<1x256xf32>
      %45 = arith.divf %27, %44 : vector<1x256xf32>
      %46 = vector.broadcast %45 : vector<1x256xf32> to vector<4x256xf32>
      %47 = arith.mulf %35, %46 : vector<4x256xf32>
      %cst_28 = arith.constant dense<0.000000e+00> : vector<4xf32>
      %48 = vector.multi_reduction <add>, %47, %cst_28 [1] : vector<4x256xf32> to vector<4xf32>
      %49 = vector.shape_cast %48 : vector<4xf32> to vector<4x1xf32>
      %c0_29 = arith.constant 0 : index
      %c0_30 = arith.constant 0 : index
      %50 = vector.load %arg8[%c0_29, %c0_30] : memref<4x1xf32, #tpu.memory_space<vmem>>, vector<4x1xf32>
      tpu.vector_store %arg8[%c0_29, %c0_30], %49 {strides = array<i32>} : memref<4x1xf32, #tpu.memory_space<vmem>>, vector<4x1xf32>,
    } else {
    }
    %c0 = arith.constant 0 : index
    %c0_1 = arith.constant 0 : index
    %c0_2 = arith.constant 0 : index
    %3 = vector.load %arg2[%c0, %c0_1, %c0_2] : memref<1x256x4xf32, #tpu.memory_space<vmem>>, vector<1x256x4xf32>
    %4 = vector.shape_cast %3 : vector<1x256x4xf32> to vector<256x4xf32>
    %5 = arith.mulf %4, %4 : vector<256x4xf32>
    %cst = arith.constant dense<0.000000e+00> : vector<256xf32>
    %6 = vector.multi_reduction <add>, %5, %cst [1] : vector<256x4xf32> to vector<256xf32>
    %7 = vector.shape_cast %6 : vector<256xf32> to vector<256x1xf32>
    %cst_3 = arith.constant 9.99999996E-13 : f32
    %8 = vector.broadcast %cst_3 : f32 to vector<256x1xf32>
    %9 = arith.addf %7, %8 : vector<256x1xf32>
    %10 = math.rsqrt %9 : vector<256x1xf32>
    %11 = vector.broadcast %10 : vector<256x1xf32> to vector<256x4xf32>
    %12 = arith.mulf %4, %11 : vector<256x4xf32>
    %13 = arith.truncf %12 : vector<256x4xf32> to vector<256x4xbf16>
    %c0_4 = arith.constant 0 : index
    %c0_5 = arith.constant 0 : index
    %14 = vector.load %arg7[%c0_4, %c0_5] : memref<4x256xbf16, #tpu.memory_space<vmem>>, vector<4x256xbf16>
    %cst_6 = arith.constant dense<0.000000e+00> : vector<256x256xf32>
    %15 = tpu.matmul %13, %14, %cst_6 {dimension_numbers = #tpu.dot_dimension_numbers<[1], [0], [0], [1], [0, 0, 1, 1], [], []>} : vector<256x4xbf16>, vector<4x256xbf16>, vector<256x256xf32> -> vector<256x256xf32>
    %c0_7 = arith.constant 0 : index
    %c0_8 = arith.constant 0 : index
    %c0_9 = arith.constant 0 : index
    %16 = vector.load %arg5[%c0_7, %c0_8, %c0_9] : memref<1x256x256xf32, #tpu.memory_space<vmem>>, vector<1x256x256xf32>
    %17 = vector.shape_cast %16 : vector<1x256x256xf32> to vector<256x256xf32>
    %18 = vector.shape_cast %15 : vector<256x256xf32> to vector<1x256x256xf32>
    tpu.vector_store %arg5[%c0_7, %c0_8, %c0_9], %18 {strides = array<i32>} : memref<1x256x256xf32, #tpu.memory_space<vmem>>, vector<1x256x256xf32>,
    %c0_10 = arith.constant 0 : index
    %c0_11 = arith.constant 0 : index
    %19 = vector.load %arg8[%c0_10, %c0_11] : memref<4x1xf32, #tpu.memory_space<vmem>>, vector<4x1xf32>
    %cst_12 = arith.constant dense<0.000000e+00> : vector<256x1xf32>
    %20 = tpu.matmul %12, %19, %cst_12 {dimension_numbers = #tpu.dot_dimension_numbers<[1], [0], [0], [1], [0, 0, 1, 1], [], []>} : vector<256x4xf32>, vector<4x1xf32>, vector<256x1xf32> -> vector<256x1xf32>
    %c0_13 = arith.constant 0 : index
    %c0_14 = arith.constant 0 : index
    %c0_15 = arith.constant 0 : index
    %21 = vector.load %arg6[%c0_13, %c0_14, %c0_15] : memref<1x256x1xf32, #tpu.memory_space<vmem>>, vector<1x256x1xf32>
    %22 = vector.shape_cast %21 : vector<1x256x1xf32> to vector<256x1xf32>
    %23 = vector.shape_cast %20 : vector<256x1xf32> to vector<1x256x1xf32>
    tpu.vector_store %arg6[%c0_13, %c0_14, %c0_15], %23 {strides = array<i32>} : memref<1x256x1xf32, #tpu.memory_space<vmem>>, vector<1x256x1xf32>,
    return
  }
  func.func @transform_0(%arg0: i32, %arg1: i32) -> (i32, i32, i32) {
    %c0_i32 = arith.constant 0 : i32
    %c0_i32_0 = arith.constant 0 : i32
    return %arg0, %arg1, %c0_i32 : i32, i32, i32
  }
  func.func @transform_1(%arg0: i32, %arg1: i32) -> (i32, i32, i32) {
    %c0_i32 = arith.constant 0 : i32
    %c0_i32_0 = arith.constant 0 : i32
    %c0_i32_1 = arith.constant 0 : i32
    return %arg0, %c0_i32, %c0_i32_0 : i32, i32, i32
  }
  func.func @transform_2(%arg0: i32, %arg1: i32) -> (i32, i32, i32) {
    %c0_i32 = arith.constant 0 : i32
    %c0_i32_0 = arith.constant 0 : i32
    %c0_i32_1 = arith.constant 0 : i32
    return %arg0, %c0_i32, %c0_i32_0 : i32, i32, i32
  }
  func.func @transform_3(%arg0: i32, %arg1: i32) -> (i32, i32, i32) {
    %c0_i32 = arith.constant 0 : i32
    %c0_i32_0 = arith.constant 0 : i32
    return %arg0, %arg1, %c0_i32 : i32, i32, i32
  }
  func.func @transform_4(%arg0: i32, %arg1: i32) -> (i32, i32, i32) {
    %c0_i32 = arith.constant 0 : i32
    %c0_i32_0 = arith.constant 0 : i32
    return %arg0, %arg1, %c0_i32 : i32, i32, i32
  }
}

</mosaic_0001>

<llo_original>
// kernel: transformer_forward.1
$region0: #{transformer_forward.1}
  #allocation0 [shape = 'u32[]', space=smem, size = 0x4, offset = 0x4, fixed_abs, tag = 'smem constant byte address 0x4 - core index']
  #allocation1 [shape = 'u32[144,128]{1,0:T(1,128)}', space=vmem, size = 0x12000, scoped, tag = 'internal scratch']
  #allocation2 [shape = 'bf16[4,256]{1,0:T(4,128)(2,1)}', space=vmem, size = 0x800, scoped, tag = 'scratch operand']
  #allocation3 [shape = 'f32[4,1]{1,0:T(4,128)}', space=vmem, size = 0x800, scoped, tag = 'scratch operand']
  %s0 = inlined_call_operand.vmem [shape: f32[2,256,4], index: 0, kind: input, shape index: {}]
  %s1 = inlined_call_operand.vmem [shape: f32[2,4,256], index: 1, kind: input, shape index: {}]
  %s2 = inlined_call_operand.vmem [shape: f32[2,1,256], index: 2, kind: input, shape index: {}]
  %s3 = inlined_call_operand.hbm [shape: f32[2,256,256], index: 3, kind: output, shape index: {0}]
  %s4 = inlined_call_operand.vmem [shape: f32[2,256,1], index: 4, kind: output, shape index: {1}]
  %5 = xla_tuple %s3, %s4
  %s6 = sld [smem:[#allocation0]]
  $region57: #{transformer_forward.1} parent=0
    _
  %s8 = ssub.s32 1, %s6
  %s9 = scalar_select 0, %s8, %s6
  $region1: #{transformer_forward.1} parent=0
    #allocation4 [shape = 'u8[524288]{0}', space=vmem, size = 0x80000, scoped, tag = 'output window, operand 0']
    #allocation5 [shape = 's32[2]{0}', space=sflag, size = 0x8, scoped, tag = 'scoped memory for transformer_forward.1']
    %10 = vsyncpa [#allocation5], 0
    %s11 = scalar_lea.sflag [#allocation5], 1
    %12 = vsyncpa %s11, 0
    loop: start=0, step=1, limit=4
    $region2: #{transformer_forward.1} parent=1 // loop_pre_header
      _
    $region3: #{transformer_forward.1} parent=1 // loop_header
      %s14 = sphi 0, %s18
      %p15 = scmp.ge.s32.totalorder %s14, 4
      %s21 = sphi 0, %s33
      %s22 = sphi 0, %s29
      %s23 = sphi 0, %s21
      %s24 = sphi 0, %s22
      %s25 = sphi 0, %s23
      %s26 = sphi 0, %s24
      %s38 = sphi 0, %s40
      %s41 = sphi 0, %s38
      %s42 = sphi 0, %s41
      %s58 = sphi 0, %s42
      %s64 = sphi 0, %s66
      %s67 = sphi 0, %s64
      %s68 = sphi 0, %s67
      %s84 = sphi 0, %s68
      %s90 = sphi 0, %s92
      %s93 = sphi 0, %s90
      %s94 = sphi 0, %s93
      %s110 = sphi 0, %s94
      %s118 = sphi 0, %s120
      %s121 = sphi 0, %s118
      %s122 = sphi 0, %s121
      %s138 = sphi 0, %s122
      %s146 = sphi 0, %s148
      %s149 = sphi 0, %s146
      %s150 = sphi 0, %s149
      %s166 = sphi 0, %s150
    $region4: #{transformer_forward.1} parent=1 // loop_header_branch
      %17 = sbr.rel (%p15) target = $region8
    $region5: #{transformer_forward.1} parent=1 // loop_body
      %s19 = ssub.s32 %s14, 1
      %s20 = ssub.s32 %s14, 2
      %s27 = sadd.s32 1, %s22
      %p28 = scmp.ge.s32.totalorder %s27, 1
      %s29 = scalar_select %p28, 0, %s27
      %s30 = sadd.s32 1, %s21
      %s31 = scalar_select %p28, %s30, %s21
      %p32 = scmp.ge.s32.totalorder %s31, 2
      %s33 = scalar_select %p32, 0, %s31
      %s34 = ssub.s32 %s21, %s33
      %s35 = ssub.s32 %s22, %s29
      %s36 = sor.u32 %s34, %s35
      %p37 = scmp.eq.s32.totalorder %s36, 0
      %s39 = sadd.s32 %s38, 1
      %s40 = scalar_select %p37, %s38, %s39
      %p43 = pneg %p37
      %p44 = scmp.eq.s32.totalorder %s14, 1
      %p45 = por %p43, %p44
      %p46 = scmp.ne.s32.totalorder %s38, %s41
      %p47 = scmp.eq.s32.totalorder %s14, 0
      %p48 = por %p46, %p47
      %p49 = scmp.ne.s32.totalorder %s38, %s41
      %p50 = scmp.eq.s32.totalorder %s19, 1
      %p51 = por %p49, %p50
      %p52 = scmp.ne.s32.totalorder %s41, %s42
      %p53 = scmp.eq.s32.totalorder %s19, 0
      %p54 = por %p52, %p53
      %p55 = scmp.ne.s32.totalorder %s41, %s42
      %p56 = scmp.eq.s32.totalorder %s20, 1
      %p57 = por %p55, %p56
      %p59 = scmp.ne.s32.totalorder %s42, %s58
      %p60 = scmp.eq.s32.totalorder %s20, 0
      %p61 = por %p59, %p60
      %s62 = ssub.s32 %s21, %s33
      %p63 = scmp.eq.s32.totalorder %s62, 0
      %s65 = sadd.s32 %s64, 1
      %s66 = scalar_select %p63, %s64, %s65
      %p69 = pneg %p63
      %p70 = scmp.eq.s32.totalorder %s14, 1
      %p71 = por %p69, %p70
      %p72 = scmp.ne.s32.totalorder %s64, %s67
      %p73 = scmp.eq.s32.totalorder %s14, 0
      %p74 = por %p72, %p73
      %p75 = scmp.ne.s32.totalorder %s64, %s67
      %p76 = scmp.eq.s32.totalorder %s19, 1
      %p77 = por %p75, %p76
      %p78 = scmp.ne.s32.totalorder %s67, %s68
      %p79 = scmp.eq.s32.totalorder %s19, 0
      %p80 = por %p78, %p79
      %p81 = scmp.ne.s32.totalorder %s67, %s68
      %p82 = scmp.eq.s32.totalorder %s20, 1
      %p83 = por %p81, %p82
      %p85 = scmp.ne.s32.totalorder %s68, %s84
      %p86 = scmp.eq.s32.totalorder %s20, 0
      %p87 = por %p85, %p86
      %s88 = ssub.s32 %s21, %s33
      %p89 = scmp.eq.s32.totalorder %s88, 0
      %s91 = sadd.s32 %s90, 1
      %s92 = scalar_select %p89, %s90, %s91
      %p95 = pneg %p89
      %p96 = scmp.eq.s32.totalorder %s14, 1
      %p97 = por %p95, %p96
      %p98 = scmp.ne.s32.totalorder %s90, %s93
      %p99 = scmp.eq.s32.totalorder %s14, 0
      %p100 = por %p98, %p99
      %p101 = scmp.ne.s32.totalorder %s90, %s93
      %p102 = scmp.eq.s32.totalorder %s19, 1
      %p103 = por %p101, %p102
      %p104 = scmp.ne.s32.totalorder %s93, %s94
      %p105 = scmp.eq.s32.totalorder %s19, 0
      %p106 = por %p104, %p105
      %p107 = scmp.ne.s32.totalorder %s93, %s94
      %p108 = scmp.eq.s32.totalorder %s20, 1
      %p109 = por %p107, %p108
      %p111 = scmp.ne.s32.totalorder %s94, %s110
      %p112 = scmp.eq.s32.totalorder %s20, 0
      %p113 = por %p111, %p112
      %s114 = ssub.s32 %s21, %s33
      %s115 = ssub.s32 %s22, %s29
      %s116 = sor.u32 %s114, %s115
      %p117 = scmp.eq.s32.totalorder %s116, 0
      %s119 = sadd.s32 %s118, 1
      %s120 = scalar_select %p117, %s118, %s119
      %p123 = pneg %p117
      %p124 = scmp.eq.s32.totalorder %s14, 1
      %p125 = por %p123, %p124
      %p126 = scmp.ne.s32.totalorder %s118, %s121
      %p127 = scmp.eq.s32.totalorder %s14, 0
      %p128 = por %p126, %p127
      %p129 = scmp.ne.s32.totalorder %s118, %s121
      %p130 = scmp.eq.s32.totalorder %s19, 1
      %p131 = por %p129, %p130
      %p132 = scmp.ne.s32.totalorder %s121, %s122
      %p133 = scmp.eq.s32.totalorder %s19, 0
      %p134 = por %p132, %p133
      %p135 = scmp.ne.s32.totalorder %s121, %s122
      %p136 = scmp.eq.s32.totalorder %s20, 1
      %p137 = por %p135, %p136
      %p139 = scmp.ne.s32.totalorder %s122, %s138
      %p140 = scmp.eq.s32.totalorder %s20, 0
      %p141 = por %p139, %p140
      %s142 = ssub.s32 %s21, %s33
      %s143 = ssub.s32 %s22, %s29
      %s144 = sor.u32 %s142, %s143
      %p145 = scmp.eq.s32.totalorder %s144, 0
      %s147 = sadd.s32 %s146, 1
      %s148 = scalar_select %p145, %s146, %s147
      %p151 = pneg %p145
      %p152 = scmp.eq.s32.totalorder %s14, 1
      %p153 = por %p151, %p152
      %p154 = scmp.ne.s32.totalorder %s146, %s149
      %p155 = scmp.eq.s32.totalorder %s14, 0
      %p156 = por %p154, %p155
      %p157 = scmp.ne.s32.totalorder %s146, %s149
      %p158 = scmp.eq.s32.totalorder %s19, 1
      %p159 = por %p157, %p158
      %p160 = scmp.ne.s32.totalorder %s149, %s150
      %p161 = scmp.eq.s32.totalorder %s19, 0
      %p162 = por %p160, %p161
      %p163 = scmp.ne.s32.totalorder %s149, %s150
      %p164 = scmp.eq.s32.totalorder %s20, 1
      %p165 = por %p163, %p164
      %p167 = scmp.ne.s32.totalorder %s150, %s166
      %p168 = scmp.eq.s32.totalorder %s20, 0
      %p169 = por %p167, %p168
      %p170 = scmp.le.s32.totalorder 1, %s14
      %p171 = scmp.lt.s32.totalorder %s14, 3
      %p172 = pnand %p170, %p171
      %p173 = pneg %p172
      // Predicated region
      $region9: #{transformer_forward.1} parent=5 // pred_check
        _
      $region10: #{transformer_forward.1} parent=5 // pred_check_branch
        %175 = sbr.rel (%p172) target = $region12
      $region11: #{transformer_forward.1} parent=5 // pred_region
        %s176 = ssub.s32 %s14, 1
      $region12: #{transformer_forward.1} parent=5 // pred_fallthru
        _
      %p177 = scmp.lt.s32.totalorder %s14, 2
      // Predicated region
      $region13: #{transformer_forward.1} parent=5 // pred_check
        %p178 = pneg %p177
      $region14: #{transformer_forward.1} parent=5 // pred_check_branch
        %180 = sbr.rel (%p178) target = $region16
      $region15: #{transformer_forward.1} parent=5 // pred_region
        // Predicated region
        $region17: #{transformer_forward.1} parent=15 // pred_check
          %p181 = pneg %p48
        $region18: #{transformer_forward.1} parent=15 // pred_check_branch
          %183 = sbr.rel (%p181) target = $region20
        $region19: #{transformer_forward.1} parent=15 // pred_region
          %s184 = smul.u32 32, %s22
          %p185 = scmp.lt.s32.totalorder %s21, 1
          %s186 = scalar_select %p185, %s21, 1
          %p187 = scmp.lt.s32.totalorder %s184, 31
          %s188 = scalar_select %p187, %s184, 31
          %s189 = smul.addr %s186, 32
          %s190 = sadd.s32 %s188, %s189
          %s191 = smul.addr %s190, 8
          %s192 = scalar_lea.vmem %s0, %s191
          %s193 = smul.u32 32, %s22
        $region20: #{transformer_forward.1} parent=15 // pred_fallthru
          _
        // Predicated region
        $region21: #{transformer_forward.1} parent=15 // pred_check
          %p194 = pneg %p74
        $region22: #{transformer_forward.1} parent=15 // pred_check_branch
          %196 = sbr.rel (%p194) target = $region24
        $region23: #{transformer_forward.1} parent=15 // pred_region
          %p197 = scmp.lt.s32.totalorder %s21, 1
          %s198 = scalar_select %p197, %s21, 1
          %s199 = smul.addr %s198, 2
          %s200 = smul.addr %s199, 4
          %s201 = scalar_lea.vmem %s1, %s200
        $region24: #{transformer_forward.1} parent=15 // pred_fallthru
          _
        // Predicated region
        $region25: #{transformer_forward.1} parent=15 // pred_check
          %p202 = pneg %p100
        $region26: #{transformer_forward.1} parent=15 // pred_check_branch
          %204 = sbr.rel (%p202) target = $region28
        $region27: #{transformer_forward.1} parent=15 // pred_region
          %p205 = scmp.lt.s32.totalorder %s21, 1
          %s206 = scalar_select %p205, %s21, 1
          %s207 = smul.addr %s206, 2
          %s208 = scalar_lea.vmem %s2, %s207
        $region28: #{transformer_forward.1} parent=15 // pred_fallthru
          _
      $region16: #{transformer_forward.1} parent=5 // pred_fallthru
        _
      %p209 = scmp.le.s32.totalorder 1, %s14
      %p210 = scmp.lt.s32.totalorder %s14, 3
      %p211 = pnand %p209, %p210
      %p212 = pneg %p211
      // Predicated region
      $region29: #{transformer_forward.1} parent=5 // pred_check
        _
      $region30: #{transformer_forward.1} parent=5 // pred_check_branch
        %214 = sbr.rel (%p211) target = $region32
      $region31: #{transformer_forward.1} parent=5 // pred_region
        %s215 = ssub.s32 %s14, 1
        %s216 = smul.u32 32, %s24
        %p217 = scmp.lt.s32.totalorder %s23, 1
        %s218 = scalar_select %p217, %s23, 1
        %p219 = scmp.lt.s32.totalorder %s216, 31
        %s220 = scalar_select %p219, %s216, 31
        %s221 = smul.addr %s218, 32
        %s222 = sadd.s32 %s220, %s221
        %s223 = smul.addr %s222, 8
        %s224 = scalar_lea.vmem %s0, %s223
        %p225 = pneg %p54
        %p226 = pneg %p51
        %p227 = scmp.lt.s32.totalorder %s23, 1
        %s228 = scalar_select %p227, %s23, 1
        %s229 = smul.addr %s228, 2
        %s230 = smul.addr %s229, 4
        %s231 = scalar_lea.vmem %s1, %s230
        %p232 = pneg %p80
        %p233 = pneg %p77
        %p234 = scmp.lt.s32.totalorder %s23, 1
        %s235 = scalar_select %p234, %s23, 1
        %s236 = smul.addr %s235, 2
        %s237 = scalar_lea.vmem %s2, %s236
        %p238 = pneg %p106
        %p239 = pneg %p103
        %p240 = pneg %p134
        %p241 = pneg %p131
        %s242 = sand.u32 %s121, 1
        %s243 = scalar_lea.sflag [#allocation5], %s242
        %s244 = sand.u32 %s121, 1
        %s245 = smul.addr %s244, 512
        %s246 = scalar_lea.vmem [#allocation4], %s245
        %p247 = pneg %p162
        %p248 = pneg %p159
        %s249 = smul.u32 32, %s24
        %p250 = scmp.lt.s32.totalorder %s23, 1
        %s251 = scalar_select %p250, %s23, 1
        %p252 = scmp.lt.s32.totalorder %s249, 31
        %s253 = scalar_select %p252, %s249, 31
        %s254 = smul.addr %s251, 32
        %s255 = sadd.s32 %s253, %s254
        %s256 = smul.addr %s255, 8
        %s257 = scalar_lea.vmem %s4, %s256
        %s258 = smul.u32 32, %s24
        %p259 = scmp.lt.s32.totalorder %s23, 1
        %s260 = scalar_select %p259, %s23, 1
        %p261 = scmp.lt.s32.totalorder %s258, 31
        %s262 = scalar_select %p261, %s258, 31
        %s263 = smul.addr %s260, 32
        %s264 = sadd.s32 %s262, %s263
        %s265 = smul.addr %s264, 8
        %s266 = scalar_lea.vmem %s0, %s265
        %s267 = smul.u32 32, %s24
        %p268 = scmp.lt.s32.totalorder %s23, 1
        %s269 = scalar_select %p268, %s23, 1
        %s270 = smul.addr %s269, 2
        %s271 = smul.addr %s270, 4
        %s272 = scalar_lea.vmem %s1, %s271
        %p273 = scmp.lt.s32.totalorder %s23, 1
        %s274 = scalar_select %p273, %s23, 1
        %s275 = smul.addr %s274, 2
        %s276 = scalar_lea.vmem %s2, %s275
        %s277 = smul.u32 32, %s24
        %s278 = smul.u32 32, %s24
        %p279 = scmp.lt.s32.totalorder %s23, 1
        %s280 = scalar_select %p279, %s23, 1
        %p281 = scmp.lt.s32.totalorder %s278, 31
        %s282 = scalar_select %p281, %s278, 31
        %s283 = smul.addr %s280, 32
        %s284 = sadd.s32 %s282, %s283
        %s285 = smul.addr %s284, 8
        %s286 = scalar_lea.vmem %s4, %s285
        %s287 = smul.u32 32, %s24
        %p289 = scmp.eq.s32.totalorder %s24, 0
        // Predicated region
        $region33: #{transformer_forward.1} parent=31 // pred_check
          %p290 = pneg %p289
        $region34: #{transformer_forward.1} parent=31 // pred_check_branch
          %292 = sbr.rel (%p290) target = $region36
        $region35: #{transformer_forward.1} parent=31 // pred_region
          %v293 = vld [vmem:[%s272] sm:$0xff]
          %v294 = vld [vmem:[%s276] sm:$0x3]
          %v295 = vmul.f32 %v293, %v293
          %v297 = vcombine.high %v295, %v295
          %vm299 = vcmask 1043456
          %v300 = vsel %vm299, %v295, 0.0
          %v301 = vrot.slane %v300, 4
          %v302 = vadd.f32 %v300, %v301
          %v303 = vrot.slane %v302, 2
          %v304 = vadd.f32 %v302, %v303
          %v305 = vrot.slane %v304, 1
          %v306 = vadd.f32 %v304, %v305
          %v307 = vsel %vm299, %v297, 0.0
          %v308 = vrot.slane %v307, 4
          %v309 = vadd.f32 %v307, %v308
          %v310 = vrot.slane %v309, 2
          %v311 = vadd.f32 %v309, %v310
          %v312 = vrot.slane %v311, 1
          %v313 = vadd.f32 %v311, %v312
          %v314 = vadd.f32 %v306, 1e-12
          %v315 = vadd.f32 %v313, 1e-12
          %v316 = vrsqrt.pop %v314
          %v317 = vrsqrt.pop %v315
          %v320 = vcombine.low %v316, %v317
          %v322 = vmul.f32 %v293, %v320
          %v324 = vcombine.high %v322, %v322
          %v326 = vpack.c.bf16 %v322, %v322
          %v327 = vpack.c.bf16 %v324, %v324
          %v330 = vcombine.low %v326, %v327
          %v332 = vunpack.c.l.s4 1983009808
          %v333 = vunpack.c.0.s8 %v332
          %v334 = vlaneseq
          %v335 = vshrl.u32 %v334, 7
          %v336 = vsub.s32 %v333, %v335
          %v337 = vrot.slane %v330, %v336
          %339 = vst [vmem:[#allocation2] sm:$0xf] %v337
          %v340 = vmul.f32 %v294, %v294
          %v342 = vlaneseq
          %v343 = vshrl.u32 %v342, 7
          %v344 = vsub.s32 0, %v343
          %v345 = vrot.slane %v340, %v344
          %v346 = vlaneseq
          %v347 = vshrl.u32 %v346, 7
          %v348 = vsub.s32 1, %v347
          %v349 = vrot.slane %v340, %v348
          %vm352 = vcmask 1040384
          %v353 = vsel %vm352, %v345, 0.0
          %v354 = vsel %vm352, %v349, 0.0
          %v355 = vadd.f32 %v353, %v354
          %356 = vadd.xlane.f32.xlu0 %v355
          %v357 = vpop.xlane.xlu0 %356
          %v358 = vrot.slane %v357, 4
          %v359 = vadd.f32 %v357, %v358
          %v360 = vrot.slane %v359, 2
          %v361 = vadd.f32 %v359, %v360
          %v362 = vrot.slane %v361, 1
          %v363 = vadd.f32 %v361, %v362
          %s364 = vtos %v363
          %s365 = sadd.f32 %s364, 1e-05
          %v366 = vstv %s365
          %v367 = vrcp.pop %v366
          %v368 = vmul.f32 %v294, %v367
          %v370 = vlaneseq
          %v371 = vshrl.u32 %v370, 7
          %v372 = vsub.s32 0, %v371
          %v373 = vrot.slane %v368, %v372
          %v374 = vlaneseq
          %v375 = vshrl.u32 %v374, 7
          %v376 = vsub.s32 1, %v375
          %v377 = vrot.slane %v368, %v376
          %v378 = vcombine.low %v373, %v377
          %v380 = vmul.f32 %v322, %v378
          %v382 = vcombine.high %v380, %v380
          %v384 = vsel %vm299, %v380, 0.0
          %v385 = vsel %vm299, %v382, 0.0
          %v386 = vadd.f32 %v384, %v385
          %387 = vadd.xlane.f32.xlu0 %v386
          %v388 = vpop.xlane.xlu0 %387
          %vm389 = vcmask 3072
          %390 = vst.msk [vmem:[#allocation3] sm:$0xf] %vm389, %v388
        $region36: #{transformer_forward.1} parent=31 // pred_fallthru
          _
        %v391 = vld [vmem:[%s266] sm:$0xff]
        %v392 = vld [vmem:[%s266 + $0x8] sm:$0xff]
        %v393 = vld [vmem:[%s266 + $0x10] sm:$0xff]
        %v394 = vld [vmem:[%s266 + $0x18] sm:$0xff]
        %v395 = vld [vmem:[%s266 + $0x20] sm:$0xff]
        %v396 = vld [vmem:[%s266 + $0x28] sm:$0xff]
        %v397 = vld [vmem:[%s266 + $0x30] sm:$0xff]
        %v398 = vld [vmem:[%s266 + $0x38] sm:$0xff]
        %v399 = vld [vmem:[%s266 + $0x40] sm:$0xff]
        %v400 = vld [vmem:[%s266 + $0x48] sm:$0xff]
        %v401 = vld [vmem:[%s266 + $0x50] sm:$0xff]
        %v402 = vld [vmem:[%s266 + $0x58] sm:$0xff]
        %v403 = vld [vmem:[%s266 + $0x60] sm:$0xff]
        %v404 = vld [vmem:[%s266 + $0x68] sm:$0xff]
        %v405 = vld [vmem:[%s266 + $0x70] sm:$0xff]
        %v406 = vld [vmem:[%s266 + $0x78] sm:$0xff]
        %v407 = vld [vmem:[%s266 + $0x80] sm:$0xff]
        %v408 = vld [vmem:[%s266 + $0x88] sm:$0xff]
        %v409 = vld [vmem:[%s266 + $0x90] sm:$0xff]
        %v410 = vld [vmem:[%s266 + $0x98] sm:$0xff]
        %v411 = vld [vmem:[%s266 + $0xa0] sm:$0xff]
        %v412 = vld [vmem:[%s266 + $0xa8] sm:$0xff]
        %v413 = vld [vmem:[%s266 + $0xb0] sm:$0xff]
        %v414 = vld [vmem:[%s266 + $0xb8] sm:$0xff]
        %v415 = vld [vmem:[%s266 + $0xc0] sm:$0xff]
        %v416 = vld [vmem:[%s266 + $0xc8] sm:$0xff]
        %v417 = vld [vmem:[%s266 + $0xd0] sm:$0xff]
        %v418 = vld [vmem:[%s266 + $0xd8] sm:$0xff]
        %v419 = vld [vmem:[%s266 + $0xe0] sm:$0xff]
        %v420 = vld [vmem:[%s266 + $0xe8] sm:$0xff]
        %v421 = vld [vmem:[%s266 + $0xf0] sm:$0xff]
        %v422 = vld [vmem:[%s266 + $0xf8] sm:$0xff]
        %v423 = vmul.f32 %v391, %v391
        %v424 = vmul.f32 %v392, %v392
        %v425 = vmul.f32 %v393, %v393
        %v426 = vmul.f32 %v394, %v394
        %v427 = vmul.f32 %v395, %v395
        %v428 = vmul.f32 %v396, %v396
        %v429 = vmul.f32 %v397, %v397
        %v430 = vmul.f32 %v398, %v398
        %v431 = vmul.f32 %v399, %v399
        %v432 = vmul.f32 %v400, %v400
        %v433 = vmul.f32 %v401, %v401
        %v434 = vmul.f32 %v402, %v402
        %v435 = vmul.f32 %v403, %v403
        %v436 = vmul.f32 %v404, %v404
        %v437 = vmul.f32 %v405, %v405
        %v438 = vmul.f32 %v406, %v406
        %v439 = vmul.f32 %v407, %v407
        %v440 = vmul.f32 %v408, %v408
        %v441 = vmul.f32 %v409, %v409
        %v442 = vmul.f32 %v410, %v410
        %v443 = vmul.f32 %v411, %v411
        %v444 = vmul.f32 %v412, %v412
        %v445 = vmul.f32 %v413, %v413
        %v446 = vmul.f32 %v414, %v414
        %v447 = vmul.f32 %v415, %v415
        %v448 = vmul.f32 %v416, %v416
        %v449 = vmul.f32 %v417, %v417
        %v450 = vmul.f32 %v418, %v418
        %v451 = vmul.f32 %v419, %v419
        %v452 = vmul.f32 %v420, %v420
        %v453 = vmul.f32 %v421, %v421
        %v454 = vmul.f32 %v422, %v422
        %vm455 = vcmask 31744
        %v456 = vsel %vm455, %v423, 0.0
        %457 = vadd.xlane.f32.xlu0 %v456
        %v458 = vpop.xlane.xlu0 %457
        %v459 = vsel %vm455, %v424, 0.0
        %460 = vadd.xlane.f32.xlu0 %v459
        %v461 = vpop.xlane.xlu0 %460
        %v462 = vsel %vm455, %v425, 0.0
        %463 = vadd.xlane.f32.xlu0 %v462
        %v464 = vpop.xlane.xlu0 %463
        %v465 = vsel %vm455, %v426, 0.0
        %466 = vadd.xlane.f32.xlu0 %v465
        %v467 = vpop.xlane.xlu0 %466
        %v468 = vsel %vm455, %v427, 0.0
        %469 = vadd.xlane.f32.xlu0 %v468
        %v470 = vpop.xlane.xlu0 %469
        %v471 = vsel %vm455, %v428, 0.0
        %472 = vadd.xlane.f32.xlu0 %v471
        %v473 = vpop.xlane.xlu0 %472
        %v474 = vsel %vm455, %v429, 0.0
        %475 = vadd.xlane.f32.xlu0 %v474
        %v476 = vpop.xlane.xlu0 %475
        %v477 = vsel %vm455, %v430, 0.0
        %478 = vadd.xlane.f32.xlu0 %v477
        %v479 = vpop.xlane.xlu0 %478
        %v480 = vsel %vm455, %v431, 0.0
        %481 = vadd.xlane.f32.xlu0 %v480
        %v482 = vpop.xlane.xlu0 %481
        %v483 = vsel %vm455, %v432, 0.0
        %484 = vadd.xlane.f32.xlu0 %v483
        %v485 = vpop.xlane.xlu0 %484
        %v486 = vsel %vm455, %v433, 0.0
        %487 = vadd.xlane.f32.xlu0 %v486
        %v488 = vpop.xlane.xlu0 %487
        %v489 = vsel %vm455, %v434, 0.0
        %490 = vadd.xlane.f32.xlu0 %v489
        %v491 = vpop.xlane.xlu0 %490
        %v492 = vsel %vm455, %v435, 0.0
        %493 = vadd.xlane.f32.xlu0 %v492
        %v494 = vpop.xlane.xlu0 %493
        %v495 = vsel %vm455, %v436, 0.0
        %496 = vadd.xlane.f32.xlu0 %v495
        %v497 = vpop.xlane.xlu0 %496
        %v498 = vsel %vm455, %v437, 0.0
        %499 = vadd.xlane.f32.xlu0 %v498
        %v500 = vpop.xlane.xlu0 %499
        %v501 = vsel %vm455, %v438, 0.0
        %502 = vadd.xlane.f32.xlu0 %v501
        %v503 = vpop.xlane.xlu0 %502
        %v504 = vsel %vm455, %v439, 0.0
        %505 = vadd.xlane.f32.xlu0 %v504
        %v506 = vpop.xlane.xlu0 %505
        %v507 = vsel %vm455, %v440, 0.0
        %508 = vadd.xlane.f32.xlu0 %v507
        %v509 = vpop.xlane.xlu0 %508
        %v510 = vsel %vm455, %v441, 0.0
        %511 = vadd.xlane.f32.xlu0 %v510
        %v512 = vpop.xlane.xlu0 %511
        %v513 = vsel %vm455, %v442, 0.0
        %514 = vadd.xlane.f32.xlu0 %v513
        %v515 = vpop.xlane.xlu0 %514
        %v516 = vsel %vm455, %v443, 0.0
        %517 = vadd.xlane.f32.xlu0 %v516
        %v518 = vpop.xlane.xlu0 %517
        %v519 = vsel %vm455, %v444, 0.0
        %520 = vadd.xlane.f32.xlu0 %v519
        %v521 = vpop.xlane.xlu0 %520
        %v522 = vsel %vm455, %v445, 0.0
        %523 = vadd.xlane.f32.xlu0 %v522
        %v524 = vpop.xlane.xlu0 %523
        %v525 = vsel %vm455, %v446, 0.0
        %526 = vadd.xlane.f32.xlu0 %v525
        %v527 = vpop.xlane.xlu0 %526
        %v528 = vsel %vm455, %v447, 0.0
        %529 = vadd.xlane.f32.xlu0 %v528
        %v530 = vpop.xlane.xlu0 %529
        %v531 = vsel %vm455, %v448, 0.0
        %532 = vadd.xlane.f32.xlu0 %v531
        %v533 = vpop.xlane.xlu0 %532
        %v534 = vsel %vm455, %v449, 0.0
        %535 = vadd.xlane.f32.xlu0 %v534
        %v536 = vpop.xlane.xlu0 %535
        %v537 = vsel %vm455, %v450, 0.0
        %538 = vadd.xlane.f32.xlu0 %v537
        %v539 = vpop.xlane.xlu0 %538
        %v540 = vsel %vm455, %v451, 0.0
        %541 = vadd.xlane.f32.xlu0 %v540
        %v542 = vpop.xlane.xlu0 %541
        %v543 = vsel %vm455, %v452, 0.0
        %544 = vadd.xlane.f32.xlu0 %v543
        %v545 = vpop.xlane.xlu0 %544
        %v546 = vsel %vm455, %v453, 0.0
        %547 = vadd.xlane.f32.xlu0 %v546
        %v548 = vpop.xlane.xlu0 %547
        %v549 = vsel %vm455, %v454, 0.0
        %550 = vadd.xlane.f32.xlu0 %v549
        %v551 = vpop.xlane.xlu0 %550
        %v552 = vadd.f32 %v458, 1e-12
        %v553 = vadd.f32 %v461, 1e-12
        %v554 = vadd.f32 %v464, 1e-12
        %v555 = vadd.f32 %v467, 1e-12
        %v556 = vadd.f32 %v470, 1e-12
        %v557 = vadd.f32 %v473, 1e-12
        %v558 = vadd.f32 %v476, 1e-12
        %v559 = vadd.f32 %v479, 1e-12
        %v560 = vadd.f32 %v482, 1e-12
        %v561 = vadd.f32 %v485, 1e-12
        %v562 = vadd.f32 %v488, 1e-12
        %v563 = vadd.f32 %v491, 1e-12
        %v564 = vadd.f32 %v494, 1e-12
        %v565 = vadd.f32 %v497, 1e-12
        %v566 = vadd.f32 %v500, 1e-12
        %v567 = vadd.f32 %v503, 1e-12
        %v568 = vadd.f32 %v506, 1e-12
        %v569 = vadd.f32 %v509, 1e-12
        %v570 = vadd.f32 %v512, 1e-12
        %v571 = vadd.f32 %v515, 1e-12
        %v572 = vadd.f32 %v518, 1e-12
        %v573 = vadd.f32 %v521, 1e-12
        %v574 = vadd.f32 %v524, 1e-12
        %v575 = vadd.f32 %v527, 1e-12
        %v576 = vadd.f32 %v530, 1e-12
        %v577 = vadd.f32 %v533, 1e-12
        %v578 = vadd.f32 %v536, 1e-12
        %v579 = vadd.f32 %v539, 1e-12
        %v580 = vadd.f32 %v542, 1e-12
        %v581 = vadd.f32 %v545, 1e-12
        %v582 = vadd.f32 %v548, 1e-12
        %v583 = vadd.f32 %v551, 1e-12
        %v584 = vrsqrt.pop %v552
        %v585 = vrsqrt.pop %v553
        %v586 = vrsqrt.pop %v554
        %v587 = vrsqrt.pop %v555
        %v588 = vrsqrt.pop %v556
        %v589 = vrsqrt.pop %v557
        %v590 = vrsqrt.pop %v558
        %v591 = vrsqrt.pop %v559
        %v592 = vrsqrt.pop %v560
        %v593 = vrsqrt.pop %v561
        %v594 = vrsqrt.pop %v562
        %v595 = vrsqrt.pop %v563
        %v596 = vrsqrt.pop %v564
        %v597 = vrsqrt.pop %v565
        %v598 = vrsqrt.pop %v566
        %v599 = vrsqrt.pop %v567
        %v600 = vrsqrt.pop %v568
        %v601 = vrsqrt.pop %v569
        %v602 = vrsqrt.pop %v570
        %v603 = vrsqrt.pop %v571
        %v604 = vrsqrt.pop %v572
        %v605 = vrsqrt.pop %v573
        %v606 = vrsqrt.pop %v574
        %v607 = vrsqrt.pop %v575
        %v608 = vrsqrt.pop %v576
        %v609 = vrsqrt.pop %v577
        %v610 = vrsqrt.pop %v578
        %v611 = vrsqrt.pop %v579
        %v612 = vrsqrt.pop %v580
        %v613 = vrsqrt.pop %v581
        %v614 = vrsqrt.pop %v582
        %v615 = vrsqrt.pop %v583
        %v616 = vmul.f32 %v391, %v584
        %v617 = vmul.f32 %v392, %v585
        %v618 = vmul.f32 %v393, %v586
        %v619 = vmul.f32 %v394, %v587
        %v620 = vmul.f32 %v395, %v588
        %v621 = vmul.f32 %v396, %v589
        %v622 = vmul.f32 %v397, %v590
        %v623 = vmul.f32 %v398, %v591
        %v624 = vmul.f32 %v399, %v592
        %v625 = vmul.f32 %v400, %v593
        %v626 = vmul.f32 %v401, %v594
        %v627 = vmul.f32 %v402, %v595
        %v628 = vmul.f32 %v403, %v596
        %v629 = vmul.f32 %v404, %v597
        %v630 = vmul.f32 %v405, %v598
        %v631 = vmul.f32 %v406, %v599
        %v632 = vmul.f32 %v407, %v600
        %v633 = vmul.f32 %v408, %v601
        %v634 = vmul.f32 %v409, %v602
        %v635 = vmul.f32 %v410, %v603
        %v636 = vmul.f32 %v411, %v604
        %v637 = vmul.f32 %v412, %v605
        %v638 = vmul.f32 %v413, %v606
        %v639 = vmul.f32 %v414, %v607
        %v640 = vmul.f32 %v415, %v608
        %v641 = vmul.f32 %v416, %v609
        %v642 = vmul.f32 %v417, %v610
        %v643 = vmul.f32 %v418, %v611
        %v644 = vmul.f32 %v419, %v612
        %v645 = vmul.f32 %v420, %v613
        %v646 = vmul.f32 %v421, %v614
        %v647 = vmul.f32 %v422, %v615
        %v648 = vpack.c.bf16 %v617, %v616
        %v649 = vpack.c.bf16 %v619, %v618
        %v650 = vpack.c.bf16 %v621, %v620
        %v651 = vpack.c.bf16 %v623, %v622
        %v652 = vpack.c.bf16 %v625, %v624
        %v653 = vpack.c.bf16 %v627, %v626
        %v654 = vpack.c.bf16 %v629, %v628
        %v655 = vpack.c.bf16 %v631, %v630
        %v656 = vpack.c.bf16 %v633, %v632
        %v657 = vpack.c.bf16 %v635, %v634
        %v658 = vpack.c.bf16 %v637, %v636
        %v659 = vpack.c.bf16 %v639, %v638
        %v660 = vpack.c.bf16 %v641, %v640
        %v661 = vpack.c.bf16 %v643, %v642
        %v662 = vpack.c.bf16 %v645, %v644
        %v663 = vpack.c.bf16 %v647, %v646
        %v664 = vld [vmem:[#allocation2] sm:$0xf]
        %v667 = vunpack.c.l.s4 1983009808
        %v668 = vunpack.c.0.s8 %v667
        %v669 = vlaneseq
        %v670 = vshrl.u32 %v669, 7
        %v671 = vsub.s32 %v668, %v670
        %v672 = vrot.slane %v664, %v671
        %v673 = vcombine.high %v672, %v672
        %v675 = vsel %vm455, %v648, 0
        %v678 = vsel %vm455, %v649, 0
        %v681 = vsel %vm455, %v650, 0
        %v684 = vsel %vm455, %v651, 0
        %v687 = vsel %vm455, %v652, 0
        %v690 = vsel %vm455, %v653, 0
        %v693 = vsel %vm455, %v654, 0
        %v696 = vsel %vm455, %v655, 0
        %v699 = vsel %vm455, %v656, 0
        %v702 = vsel %vm455, %v657, 0
        %v705 = vsel %vm455, %v658, 0
        %v708 = vsel %vm455, %v659, 0
        %v711 = vsel %vm455, %v660, 0
        %v714 = vsel %vm455, %v661, 0
        %v717 = vsel %vm455, %v662, 0
        %v720 = vsel %vm455, %v663, 0
        %vm722 = vcmask 1041408
        %v724 = vsel %vm722, %v672, 0
        %v727 = vsel %vm722, %v673, 0
        %729 = vmatprep.subr.bf16.mxu0 %v727
        %730 = vmatpush1.bf16.msra.mxu0 %v724
        %731 = vmatprep.subr.bf16.mxu0 0
        %732 = vmatpush1.bf16.msra.mxu0 0
        %733 = vmatprep.subr.bf16.mxu0 0
        %734 = vmatpush1.bf16.msra.mxu0 0
        %735 = vmatprep.subr.bf16.mxu0 0
        %736 = vmatpush1.bf16.msra.mxu0 0
        %737 = vmatprep.subr.bf16.mxu0 0
        %738 = vmatpush1.bf16.msra.mxu0 0
        %739 = vmatprep.subr.bf16.mxu0 0
        %740 = vmatpush1.bf16.msra.mxu0 0
        %741 = vmatprep.subr.bf16.mxu0 0
        %742 = vmatpush1.bf16.msra.mxu0 0
        %743 = vmatprep.subr.bf16.mxu0 0
        %744 = vmatpush1.bf16.msra.mxu0 0
        %745 = vmatprep.subr.bf16.mxu0 0
        %746 = vmatpush1.bf16.msra.mxu0 0
        %747 = vmatprep.subr.bf16.mxu0 0
        %748 = vmatpush1.bf16.msra.mxu0 0
        %749 = vmatprep.subr.bf16.mxu0 0
        %750 = vmatpush1.bf16.msra.mxu0 0
        %751 = vmatprep.subr.bf16.mxu0 0
        %752 = vmatpush1.bf16.msra.mxu0 0
        %753 = vmatprep.subr.bf16.mxu0 0
        %754 = vmatpush1.bf16.msra.mxu0 0
        %755 = vmatprep.subr.bf16.mxu0 0
        %756 = vmatpush1.bf16.msra.mxu0 0
        %757 = vmatprep.subr.bf16.mxu0 0
        %758 = vmatpush1.bf16.msra.mxu0 0
        %759 = vmatprep.subr.bf16.mxu0 0
        %760 = vmatpush1.bf16.msra.mxu0 0
        %761 = vmatprep.mubr.bf16.mxu0 0
        %762 = vmatmul.mubr.bf16.gmra.mrb[0].mxu0 %v675
        %v763 = vpop.f32.mrb[0].mxu0
        %v764 = vadd.f32 0.0, %v763
        %v765 = vpop.f32.mrb[0].mxu0
        %v766 = vadd.f32 0.0, %v765
        %v767 = vpop.f32.mrb[0].mxu0
        %v768 = vadd.f32 0.0, %v767
        %v769 = vpop.f32.mrb[0].mxu0
        %v770 = vadd.f32 0.0, %v769
        %771 = vmatprep.mubr.bf16.mxu0 0
        %772 = vmatmul.mubr.bf16.gmra.mrb[0].mxu0 %v678
        %v773 = vpop.f32.mrb[0].mxu0
        %v774 = vadd.f32 0.0, %v773
        %v775 = vpop.f32.mrb[0].mxu0
        %v776 = vadd.f32 0.0, %v775
        %v777 = vpop.f32.mrb[0].mxu0
        %v778 = vadd.f32 0.0, %v777
        %v779 = vpop.f32.mrb[0].mxu0
        %v780 = vadd.f32 0.0, %v779
        %781 = vmatprep.mubr.bf16.mxu0 0
        %782 = vmatmul.mubr.bf16.gmra.mrb[0].mxu0 %v681
        %v783 = vpop.f32.mrb[0].mxu0
        %v784 = vadd.f32 0.0, %v783
        %v785 = vpop.f32.mrb[0].mxu0
        %v786 = vadd.f32 0.0, %v785
        %v787 = vpop.f32.mrb[0].mxu0
        %v788 = vadd.f32 0.0, %v787
        %v789 = vpop.f32.mrb[0].mxu0
        %v790 = vadd.f32 0.0, %v789
        %791 = vmatprep.mubr.bf16.mxu0 0
        %792 = vmatmul.mubr.bf16.gmra.mrb[0].mxu0 %v684
        %v793 = vpop.f32.mrb[0].mxu0
        %v794 = vadd.f32 0.0, %v793
        %v795 = vpop.f32.mrb[0].mxu0
        %v796 = vadd.f32 0.0, %v795
        %v797 = vpop.f32.mrb[0].mxu0
        %v798 = vadd.f32 0.0, %v797
        %v799 = vpop.f32.mrb[0].mxu0
        %v800 = vadd.f32 0.0, %v799
        %801 = vmatprep.mubr.bf16.mxu0 0
        %802 = vmatmul.mubr.bf16.gmra.mrb[0].mxu0 %v687
        %v803 = vpop.f32.mrb[0].mxu0
        %v804 = vadd.f32 0.0, %v803
        %v805 = vpop.f32.mrb[0].mxu0
        %v806 = vadd.f32 0.0, %v805
        %v807 = vpop.f32.mrb[0].mxu0
        %v808 = vadd.f32 0.0, %v807
        %v809 = vpop.f32.mrb[0].mxu0
        %v810 = vadd.f32 0.0, %v809
        %811 = vmatprep.mubr.bf16.mxu0 0
        %812 = vmatmul.mubr.bf16.gmra.mrb[0].mxu0 %v690
        %v813 = vpop.f32.mrb[0].mxu0
        %v814 = vadd.f32 0.0, %v813
        %v815 = vpop.f32.mrb[0].mxu0
        %v816 = vadd.f32 0.0, %v815
        %v817 = vpop.f32.mrb[0].mxu0
        %v818 = vadd.f32 0.0, %v817
        %v819 = vpop.f32.mrb[0].mxu0
        %v820 = vadd.f32 0.0, %v819
        %821 = vmatprep.mubr.bf16.mxu0 0
        %822 = vmatmul.mubr.bf16.gmra.mrb[0].mxu0 %v693
        %v823 = vpop.f32.mrb[0].mxu0
        %v824 = vadd.f32 0.0, %v823
        %v825 = vpop.f32.mrb[0].mxu0
        %v826 = vadd.f32 0.0, %v825
        %v827 = vpop.f32.mrb[0].mxu0
        %v828 = vadd.f32 0.0, %v827
        %v829 = vpop.f32.mrb[0].mxu0
        %v830 = vadd.f32 0.0, %v829
        %831 = vmatprep.mubr.bf16.mxu0 0
        %832 = vmatmul.mubr.bf16.gmra.mrb[0].mxu0 %v696
        %v833 = vpop.f32.mrb[0].mxu0
        %v834 = vadd.f32 0.0, %v833
        %v835 = vpop.f32.mrb[0].mxu0
        %v836 = vadd.f32 0.0, %v835
        %v837 = vpop.f32.mrb[0].mxu0
        %v838 = vadd.f32 0.0, %v837
        %v839 = vpop.f32.mrb[0].mxu0
        %v840 = vadd.f32 0.0, %v839
        %841 = vmatprep.mubr.bf16.mxu0 0
        %842 = vmatmul.mubr.bf16.gmra.mrb[0].mxu0 %v699
        %v843 = vpop.f32.mrb[0].mxu0
        %v844 = vadd.f32 0.0, %v843
        %v845 = vpop.f32.mrb[0].mxu0
        %v846 = vadd.f32 0.0, %v845
        %v847 = vpop.f32.mrb[0].mxu0
        %v848 = vadd.f32 0.0, %v847
        %v849 = vpop.f32.mrb[0].mxu0
        %v850 = vadd.f32 0.0, %v849
        %851 = vmatprep.mubr.bf16.mxu0 0
        %852 = vmatmul.mubr.bf16.gmra.mrb[0].mxu0 %v702
        %v853 = vpop.f32.mrb[0].mxu0
        %v854 = vadd.f32 0.0, %v853
        %v855 = vpop.f32.mrb[0].mxu0
        %v856 = vadd.f32 0.0, %v855
        %v857 = vpop.f32.mrb[0].mxu0
        %v858 = vadd.f32 0.0, %v857
        %v859 = vpop.f32.mrb[0].mxu0
        %v860 = vadd.f32 0.0, %v859
        %861 = vmatprep.mubr.bf16.mxu0 0
        %862 = vmatmul.mubr.bf16.gmra.mrb[0].mxu0 %v705
        %v863 = vpop.f32.mrb[0].mxu0
        %v864 = vadd.f32 0.0, %v863
        %v865 = vpop.f32.mrb[0].mxu0
        %v866 = vadd.f32 0.0, %v865
        %v867 = vpop.f32.mrb[0].mxu0
        %v868 = vadd.f32 0.0, %v867
        %v869 = vpop.f32.mrb[0].mxu0
        %v870 = vadd.f32 0.0, %v869
        %871 = vmatprep.mubr.bf16.mxu0 0
        %872 = vmatmul.mubr.bf16.gmra.mrb[0].mxu0 %v708
        %v873 = vpop.f32.mrb[0].mxu0
        %v874 = vadd.f32 0.0, %v873
        %v875 = vpop.f32.mrb[0].mxu0
        %v876 = vadd.f32 0.0, %v875
        %v877 = vpop.f32.mrb[0].mxu0
        %v878 = vadd.f32 0.0, %v877
        %v879 = vpop.f32.mrb[0].mxu0
        %v880 = vadd.f32 0.0, %v879
        %881 = vmatprep.mubr.bf16.mxu0 0
        %882 = vmatmul.mubr.bf16.gmra.mrb[0].mxu0 %v711
        %v883 = vpop.f32.mrb[0].mxu0
        %v884 = vadd.f32 0.0, %v883
        %v885 = vpop.f32.mrb[0].mxu0
        %v886 = vadd.f32 0.0, %v885
        %v887 = vpop.f32.mrb[0].mxu0
        %v888 = vadd.f32 0.0, %v887
        %v889 = vpop.f32.mrb[0].mxu0
        %v890 = vadd.f32 0.0, %v889
        %891 = vmatprep.mubr.bf16.mxu0 0
        %892 = vmatmul.mubr.bf16.gmra.mrb[0].mxu0 %v714
        %v893 = vpop.f32.mrb[0].mxu0
        %v894 = vadd.f32 0.0, %v893
        %v895 = vpop.f32.mrb[0].mxu0
        %v896 = vadd.f32 0.0, %v895
        %v897 = vpop.f32.mrb[0].mxu0
        %v898 = vadd.f32 0.0, %v897
        %v899 = vpop.f32.mrb[0].mxu0
        %v900 = vadd.f32 0.0, %v899
        %901 = vmatprep.mubr.bf16.mxu0 0
        %902 = vmatmul.mubr.bf16.gmra.mrb[0].mxu0 %v717
        %v903 = vpop.f32.mrb[0].mxu0
        %v904 = vadd.f32 0.0, %v903
        %v905 = vpop.f32.mrb[0].mxu0
        %v906 = vadd.f32 0.0, %v905
        %v907 = vpop.f32.mrb[0].mxu0
        %v908 = vadd.f32 0.0, %v907
        %v909 = vpop.f32.mrb[0].mxu0
        %v910 = vadd.f32 0.0, %v909
        %911 = vmatprep.mubr.bf16.mxu0 0
        %912 = vmatmul.mubr.bf16.gmra.mrb[0].mxu0 %v720
        %v913 = vpop.f32.mrb[0].mxu0
        %v914 = vadd.f32 0.0, %v913
        %v915 = vpop.f32.mrb[0].mxu0
        %v916 = vadd.f32 0.0, %v915
        %v917 = vpop.f32.mrb[0].mxu0
        %v918 = vadd.f32 0.0, %v917
        %v919 = vpop.f32.mrb[0].mxu0
        %v920 = vadd.f32 0.0, %v919
        %921 = vdwg.mxu0
        %922 = vst [vmem:[%s246] sm:$0xff] %v764
        %923 = vst [vmem:[%s246 + $0x8] sm:$0xff] %v766
        %924 = vst [vmem:[%s246 + $0x10] sm:$0xff] %v768
        %925 = vst [vmem:[%s246 + $0x18] sm:$0xff] %v770
        %926 = vst [vmem:[%s246 + $0x20] sm:$0xff] %v774
        %927 = vst [vmem:[%s246 + $0x28] sm:$0xff] %v776
        %928 = vst [vmem:[%s246 + $0x30] sm:$0xff] %v778
        %929 = vst [vmem:[%s246 + $0x38] sm:$0xff] %v780
        %930 = vst [vmem:[%s246 + $0x40] sm:$0xff] %v784
        %931 = vst [vmem:[%s246 + $0x48] sm:$0xff] %v786
        %932 = vst [vmem:[%s246 + $0x50] sm:$0xff] %v788
        %933 = vst [vmem:[%s246 + $0x58] sm:$0xff] %v790
        %934 = vst [vmem:[%s246 + $0x60] sm:$0xff] %v794
        %935 = vst [vmem:[%s246 + $0x68] sm:$0xff] %v796
        %936 = vst [vmem:[%s246 + $0x70] sm:$0xff] %v798
        %937 = vst [vmem:[%s246 + $0x78] sm:$0xff] %v800
        %938 = vst [vmem:[%s246 + $0x80] sm:$0xff] %v804
        %939 = vst [vmem:[%s246 + $0x88] sm:$0xff] %v806
        %940 = vst [vmem:[%s246 + $0x90] sm:$0xff] %v808
        %941 = vst [vmem:[%s246 + $0x98] sm:$0xff] %v810
        %942 = vst [vmem:[%s246 + $0xa0] sm:$0xff] %v814
        %943 = vst [vmem:[%s246 + $0xa8] sm:$0xff] %v816
        %944 = vst [vmem:[%s246 + $0xb0] sm:$0xff] %v818
        %945 = vst [vmem:[%s246 + $0xb8] sm:$0xff] %v820
        %946 = vst [vmem:[%s246 + $0xc0] sm:$0xff] %v824
        %947 = vst [vmem:[%s246 + $0xc8] sm:$0xff] %v826
        %948 = vst [vmem:[%s246 + $0xd0] sm:$0xff] %v828
        %949 = vst [vmem:[%s246 + $0xd8] sm:$0xff] %v830
        %950 = vst [vmem:[%s246 + $0xe0] sm:$0xff] %v834
        %951 = vst [vmem:[%s246 + $0xe8] sm:$0xff] %v836
        %952 = vst [vmem:[%s246 + $0xf0] sm:$0xff] %v838
        %953 = vst [vmem:[%s246 + $0xf8] sm:$0xff] %v840
        %954 = vst [vmem:[%s246 + $0x100] sm:$0xff] %v844
        %955 = vst [vmem:[%s246 + $0x108] sm:$0xff] %v846
        %956 = vst [vmem:[%s246 + $0x110] sm:$0xff] %v848
        %957 = vst [vmem:[%s246 + $0x118] sm:$0xff] %v850
        %958 = vst [vmem:[%s246 + $0x120] sm:$0xff] %v854
        %959 = vst [vmem:[%s246 + $0x128] sm:$0xff] %v856
        %960 = vst [vmem:[%s246 + $0x130] sm:$0xff] %v858
        %961 = vst [vmem:[%s246 + $0x138] sm:$0xff] %v860
        %962 = vst [vmem:[%s246 + $0x140] sm:$0xff] %v864
        %963 = vst [vmem:[%s246 + $0x148] sm:$0xff] %v866
        %964 = vst [vmem:[%s246 + $0x150] sm:$0xff] %v868
        %965 = vst [vmem:[%s246 + $0x158] sm:$0xff] %v870
        %966 = vst [vmem:[%s246 + $0x160] sm:$0xff] %v874
        %967 = vst [vmem:[%s246 + $0x168] sm:$0xff] %v876
        %968 = vst [vmem:[%s246 + $0x170] sm:$0xff] %v878
        %969 = vst [vmem:[%s246 + $0x178] sm:$0xff] %v880
        %970 = vst [vmem:[%s246 + $0x180] sm:$0xff] %v884
        %971 = vst [vmem:[%s246 + $0x188] sm:$0xff] %v886
        %972 = vst [vmem:[%s246 + $0x190] sm:$0xff] %v888
        %973 = vst [vmem:[%s246 + $0x198] sm:$0xff] %v890
        %974 = vst [vmem:[%s246 + $0x1a0] sm:$0xff] %v894
        %975 = vst [vmem:[%s246 + $0x1a8] sm:$0xff] %v896
        %976 = vst [vmem:[%s246 + $0x1b0] sm:$0xff] %v898
        %977 = vst [vmem:[%s246 + $0x1b8] sm:$0xff] %v900
        %978 = vst [vmem:[%s246 + $0x1c0] sm:$0xff] %v904
        %979 = vst [vmem:[%s246 + $0x1c8] sm:$0xff] %v906
        %980 = vst [vmem:[%s246 + $0x1d0] sm:$0xff] %v908
        %981 = vst [vmem:[%s246 + $0x1d8] sm:$0xff] %v910
        %982 = vst [vmem:[%s246 + $0x1e0] sm:$0xff] %v914
        %983 = vst [vmem:[%s246 + $0x1e8] sm:$0xff] %v916
        %984 = vst [vmem:[%s246 + $0x1f0] sm:$0xff] %v918
        %985 = vst [vmem:[%s246 + $0x1f8] sm:$0xff] %v920
        %v986 = vld [vmem:[#allocation3] sm:$0xf]
        %v988 = vsel %vm455, %v616, 0
        %v991 = vsel %vm455, %v617, 0
        %v994 = vsel %vm455, %v618, 0
        %v997 = vsel %vm455, %v619, 0
        %v1000 = vsel %vm455, %v620, 0
        %v1003 = vsel %vm455, %v621, 0
        %v1006 = vsel %vm455, %v622, 0
        %v1009 = vsel %vm455, %v623, 0
        %v1012 = vsel %vm455, %v624, 0
        %v1015 = vsel %vm455, %v625, 0
        %v1018 = vsel %vm455, %v626, 0
        %v1021 = vsel %vm455, %v627, 0
        %v1024 = vsel %vm455, %v628, 0
        %v1027 = vsel %vm455, %v629, 0
        %v1030 = vsel %vm455, %v630, 0
        %v1033 = vsel %vm455, %v631, 0
        %v1036 = vsel %vm455, %v632, 0
        %v1039 = vsel %vm455, %v633, 0
        %v1042 = vsel %vm455, %v634, 0
        %v1045 = vsel %vm455, %v635, 0
        %v1048 = vsel %vm455, %v636, 0
        %v1051 = vsel %vm455, %v637, 0
        %v1054 = vsel %vm455, %v638, 0
        %v1057 = vsel %vm455, %v639, 0
        %v1060 = vsel %vm455, %v640, 0
        %v1063 = vsel %vm455, %v641, 0
        %v1066 = vsel %vm455, %v642, 0
        %v1069 = vsel %vm455, %v643, 0
        %v1072 = vsel %vm455, %v644, 0
        %v1075 = vsel %vm455, %v645, 0
        %v1078 = vsel %vm455, %v646, 0
        %v1081 = vsel %vm455, %v647, 0
        %vm1083 = vcmask 1043456
        %v1085 = vsel %vm1083, %v986, 0
        %1087 = vmatprep.subr.mxu0 0.0
        %1088 = vmatpush1.msra.mxu0 %v1085
        %1089 = vmatprep.subr.mxu0 0.0
        %1090 = vmatpush1.msra.mxu0 0.0
        %1091 = vmatprep.subr.mxu0 0.0
        %1092 = vmatpush1.msra.mxu0 0.0
        %1093 = vmatprep.subr.mxu0 0.0
        %1094 = vmatpush1.msra.mxu0 0.0
        %1095 = vmatprep.subr.mxu0 0.0
        %1096 = vmatpush1.msra.mxu0 0.0
        %1097 = vmatprep.subr.mxu0 0.0
        %1098 = vmatpush1.msra.mxu0 0.0
        %1099 = vmatprep.subr.mxu0 0.0
        %1100 = vmatpush1.msra.mxu0 0.0
        %1101 = vmatprep.subr.mxu0 0.0
        %1102 = vmatpush1.msra.mxu0 0.0
        %1103 = vmatprep.subr.mxu0 0.0
        %1104 = vmatpush1.msra.mxu0 0.0
        %1105 = vmatprep.subr.mxu0 0.0
        %1106 = vmatpush1.msra.mxu0 0.0
        %1107 = vmatprep.subr.mxu0 0.0
        %1108 = vmatpush1.msra.mxu0 0.0
        %1109 = vmatprep.subr.mxu0 0.0
        %1110 = vmatpush1.msra.mxu0 0.0
        %1111 = vmatprep.subr.mxu0 0.0
        %1112 = vmatpush1.msra.mxu0 0.0
        %1113 = vmatprep.subr.mxu0 0.0
        %1114 = vmatpush1.msra.mxu0 0.0
        %1115 = vmatprep.subr.mxu0 0.0
        %1116 = vmatpush1.msra.mxu0 0.0
        %1117 = vmatprep.subr.mxu0 0.0
        %1118 = vmatpush1.msra.mxu0 0.0
        %1119 = vmatprep.subr.mxu0 0.0
        %1120 = vmatpush1.msra.mxu0 0.0
        %1121 = vmatprep.subr.mxu0 0.0
        %1122 = vmatpush1.msra.mxu0 0.0
        %1123 = vmatprep.subr.mxu0 0.0
        %1124 = vmatpush1.msra.mxu0 0.0
        %1125 = vmatprep.subr.mxu0 0.0
        %1126 = vmatpush1.msra.mxu0 0.0
        %1127 = vmatprep.subr.mxu0 0.0
        %1128 = vmatpush1.msra.mxu0 0.0
        %1129 = vmatprep.subr.mxu0 0.0
        %1130 = vmatpush1.msra.mxu0 0.0
        %1131 = vmatprep.subr.mxu0 0.0
        %1132 = vmatpush1.msra.mxu0 0.0
        %1133 = vmatprep.subr.mxu0 0.0
        %1134 = vmatpush1.msra.mxu0 0.0
        %1135 = vmatprep.subr.mxu0 0.0
        %1136 = vmatpush1.msra.mxu0 0.0
        %1137 = vmatprep.subr.mxu0 0.0
        %1138 = vmatpush1.msra.mxu0 0.0
        %1139 = vmatprep.subr.mxu0 0.0
        %1140 = vmatpush1.msra.mxu0 0.0
        %1141 = vmatprep.subr.mxu0 0.0
        %1142 = vmatpush1.msra.mxu0 0.0
        %1143 = vmatprep.subr.mxu0 0.0
        %1144 = vmatpush1.msra.mxu0 0.0
        %1145 = vmatprep.subr.mxu0 0.0
        %1146 = vmatpush1.msra.mxu0 0.0
        %1147 = vmatprep.subr.mxu0 0.0
        %1148 = vmatpush1.msra.mxu0 0.0
        %1149 = vmatprep.subr.mxu0 0.0
        %1150 = vmatpush1.msra.mxu0 0.0
        %1151 = vmatprep.mubr.f32.mxu0 0.0
        %1152 = vmatmul.mubr.f32.gmra.mrb[0].mxu0 %v988
        %v1153 = vpop.f32.mrb[0].mxu0
        %v1154 = vadd.f32 0.0, %v1153
        %v1155 = vpop.f32.mrb[0].mxu0
        %1156 = vmatprep.mubr.f32.mxu0 0.0
        %1157 = vmatmul.mubr.f32.gmra.mrb[0].mxu0 %v991
        %v1158 = vpop.f32.mrb[0].mxu0
        %v1159 = vadd.f32 0.0, %v1158
        %v1160 = vpop.f32.mrb[0].mxu0
        %1161 = vmatprep.mubr.f32.mxu0 0.0
        %1162 = vmatmul.mubr.f32.gmra.mrb[0].mxu0 %v994
        %v1163 = vpop.f32.mrb[0].mxu0
        %v1164 = vadd.f32 0.0, %v1163
        %v1165 = vpop.f32.mrb[0].mxu0
        %1166 = vmatprep.mubr.f32.mxu0 0.0
        %1167 = vmatmul.mubr.f32.gmra.mrb[0].mxu0 %v997
        %v1168 = vpop.f32.mrb[0].mxu0
        %v1169 = vadd.f32 0.0, %v1168
        %v1170 = vpop.f32.mrb[0].mxu0
        %1171 = vmatprep.mubr.f32.mxu0 0.0
        %1172 = vmatmul.mubr.f32.gmra.mrb[0].mxu0 %v1000
        %v1173 = vpop.f32.mrb[0].mxu0
        %v1174 = vadd.f32 0.0, %v1173
        %v1175 = vpop.f32.mrb[0].mxu0
        %1176 = vmatprep.mubr.f32.mxu0 0.0
        %1177 = vmatmul.mubr.f32.gmra.mrb[0].mxu0 %v1003
        %v1178 = vpop.f32.mrb[0].mxu0
        %v1179 = vadd.f32 0.0, %v1178
        %v1180 = vpop.f32.mrb[0].mxu0
        %1181 = vmatprep.mubr.f32.mxu0 0.0
        %1182 = vmatmul.mubr.f32.gmra.mrb[0].mxu0 %v1006
        %v1183 = vpop.f32.mrb[0].mxu0
        %v1184 = vadd.f32 0.0, %v1183
        %v1185 = vpop.f32.mrb[0].mxu0
        %1186 = vmatprep.mubr.f32.mxu0 0.0
        %1187 = vmatmul.mubr.f32.gmra.mrb[0].mxu0 %v1009
        %v1188 = vpop.f32.mrb[0].mxu0
        %v1189 = vadd.f32 0.0, %v1188
        %v1190 = vpop.f32.mrb[0].mxu0
        %1191 = vmatprep.mubr.f32.mxu0 0.0
        %1192 = vmatmul.mubr.f32.gmra.mrb[0].mxu0 %v1012
        %v1193 = vpop.f32.mrb[0].mxu0
        %v1194 = vadd.f32 0.0, %v1193
        %v1195 = vpop.f32.mrb[0].mxu0
        %1196 = vmatprep.mubr.f32.mxu0 0.0
        %1197 = vmatmul.mubr.f32.gmra.mrb[0].mxu0 %v1015
        %v1198 = vpop.f32.mrb[0].mxu0
        %v1199 = vadd.f32 0.0, %v1198
        %v1200 = vpop.f32.mrb[0].mxu0
        %1201 = vmatprep.mubr.f32.mxu0 0.0
        %1202 = vmatmul.mubr.f32.gmra.mrb[0].mxu0 %v1018
        %v1203 = vpop.f32.mrb[0].mxu0
        %v1204 = vadd.f32 0.0, %v1203
        %v1205 = vpop.f32.mrb[0].mxu0
        %1206 = vmatprep.mubr.f32.mxu0 0.0
        %1207 = vmatmul.mubr.f32.gmra.mrb[0].mxu0 %v1021
        %v1208 = vpop.f32.mrb[0].mxu0
        %v1209 = vadd.f32 0.0, %v1208
        %v1210 = vpop.f32.mrb[0].mxu0
        %1211 = vmatprep.mubr.f32.mxu0 0.0
        %1212 = vmatmul.mubr.f32.gmra.mrb[0].mxu0 %v1024
        %v1213 = vpop.f32.mrb[0].mxu0
        %v1214 = vadd.f32 0.0, %v1213
        %v1215 = vpop.f32.mrb[0].mxu0
        %1216 = vmatprep.mubr.f32.mxu0 0.0
        %1217 = vmatmul.mubr.f32.gmra.mrb[0].mxu0 %v1027
        %v1218 = vpop.f32.mrb[0].mxu0
        %v1219 = vadd.f32 0.0, %v1218
        %v1220 = vpop.f32.mrb[0].mxu0
        %1221 = vmatprep.mubr.f32.mxu0 0.0
        %1222 = vmatmul.mubr.f32.gmra.mrb[0].mxu0 %v1030
        %v1223 = vpop.f32.mrb[0].mxu0
        %v1224 = vadd.f32 0.0, %v1223
        %v1225 = vpop.f32.mrb[0].mxu0
        %1226 = vmatprep.mubr.f32.mxu0 0.0
        %1227 = vmatmul.mubr.f32.gmra.mrb[0].mxu0 %v1033
        %v1228 = vpop.f32.mrb[0].mxu0
        %v1229 = vadd.f32 0.0, %v1228
        %v1230 = vpop.f32.mrb[0].mxu0
        %1231 = vmatprep.mubr.f32.mxu0 0.0
        %1232 = vmatmul.mubr.f32.gmra.mrb[0].mxu0 %v1036
        %v1233 = vpop.f32.mrb[0].mxu0
        %v1234 = vadd.f32 0.0, %v1233
        %v1235 = vpop.f32.mrb[0].mxu0
        %1236 = vmatprep.mubr.f32.mxu0 0.0
        %1237 = vmatmul.mubr.f32.gmra.mrb[0].mxu0 %v1039
        %v1238 = vpop.f32.mrb[0].mxu0
        %v1239 = vadd.f32 0.0, %v1238
        %v1240 = vpop.f32.mrb[0].mxu0
        %1241 = vmatprep.mubr.f32.mxu0 0.0
        %1242 = vmatmul.mubr.f32.gmra.mrb[0].mxu0 %v1042
        %v1243 = vpop.f32.mrb[0].mxu0
        %v1244 = vadd.f32 0.0, %v1243
        %v1245 = vpop.f32.mrb[0].mxu0
        %1246 = vmatprep.mubr.f32.mxu0 0.0
        %1247 = vmatmul.mubr.f32.gmra.mrb[0].mxu0 %v1045
        %v1248 = vpop.f32.mrb[0].mxu0
        %v1249 = vadd.f32 0.0, %v1248
        %v1250 = vpop.f32.mrb[0].mxu0
        %1251 = vmatprep.mubr.f32.mxu0 0.0
        %1252 = vmatmul.mubr.f32.gmra.mrb[0].mxu0 %v1048
        %v1253 = vpop.f32.mrb[0].mxu0
        %v1254 = vadd.f32 0.0, %v1253
        %v1255 = vpop.f32.mrb[0].mxu0
        %1256 = vmatprep.mubr.f32.mxu0 0.0
        %1257 = vmatmul.mubr.f32.gmra.mrb[0].mxu0 %v1051
        %v1258 = vpop.f32.mrb[0].mxu0
        %v1259 = vadd.f32 0.0, %v1258
        %v1260 = vpop.f32.mrb[0].mxu0
        %1261 = vmatprep.mubr.f32.mxu0 0.0
        %1262 = vmatmul.mubr.f32.gmra.mrb[0].mxu0 %v1054
        %v1263 = vpop.f32.mrb[0].mxu0
        %v1264 = vadd.f32 0.0, %v1263
        %v1265 = vpop.f32.mrb[0].mxu0
        %1266 = vmatprep.mubr.f32.mxu0 0.0
        %1267 = vmatmul.mubr.f32.gmra.mrb[0].mxu0 %v1057
        %v1268 = vpop.f32.mrb[0].mxu0
        %v1269 = vadd.f32 0.0, %v1268
        %v1270 = vpop.f32.mrb[0].mxu0
        %1271 = vmatprep.mubr.f32.mxu0 0.0
        %1272 = vmatmul.mubr.f32.gmra.mrb[0].mxu0 %v1060
        %v1273 = vpop.f32.mrb[0].mxu0
        %v1274 = vadd.f32 0.0, %v1273
        %v1275 = vpop.f32.mrb[0].mxu0
        %1276 = vmatprep.mubr.f32.mxu0 0.0
        %1277 = vmatmul.mubr.f32.gmra.mrb[0].mxu0 %v1063
        %v1278 = vpop.f32.mrb[0].mxu0
        %v1279 = vadd.f32 0.0, %v1278
        %v1280 = vpop.f32.mrb[0].mxu0
        %1281 = vmatprep.mubr.f32.mxu0 0.0
        %1282 = vmatmul.mubr.f32.gmra.mrb[0].mxu0 %v1066
        %v1283 = vpop.f32.mrb[0].mxu0
        %v1284 = vadd.f32 0.0, %v1283
        %v1285 = vpop.f32.mrb[0].mxu0
        %1286 = vmatprep.mubr.f32.mxu0 0.0
        %1287 = vmatmul.mubr.f32.gmra.mrb[0].mxu0 %v1069
        %v1288 = vpop.f32.mrb[0].mxu0
        %v1289 = vadd.f32 0.0, %v1288
        %v1290 = vpop.f32.mrb[0].mxu0
        %1291 = vmatprep.mubr.f32.mxu0 0.0
        %1292 = vmatmul.mubr.f32.gmra.mrb[0].mxu0 %v1072
        %v1293 = vpop.f32.mrb[0].mxu0
        %v1294 = vadd.f32 0.0, %v1293
        %v1295 = vpop.f32.mrb[0].mxu0
        %1296 = vmatprep.mubr.f32.mxu0 0.0
        %1297 = vmatmul.mubr.f32.gmra.mrb[0].mxu0 %v1075
        %v1298 = vpop.f32.mrb[0].mxu0
        %v1299 = vadd.f32 0.0, %v1298
        %v1300 = vpop.f32.mrb[0].mxu0
        %1301 = vmatprep.mubr.f32.mxu0 0.0
        %1302 = vmatmul.mubr.f32.gmra.mrb[0].mxu0 %v1078
        %v1303 = vpop.f32.mrb[0].mxu0
        %v1304 = vadd.f32 0.0, %v1303
        %v1305 = vpop.f32.mrb[0].mxu0
        %1306 = vmatprep.mubr.f32.mxu0 0.0
        %1307 = vmatmul.mubr.f32.gmra.mrb[0].mxu0 %v1081
        %v1308 = vpop.f32.mrb[0].mxu0
        %v1309 = vadd.f32 0.0, %v1308
        %v1310 = vpop.f32.mrb[0].mxu0
        %1311 = vdwg.mxu0
        %vm1312 = vcmask 7168
        %1313 = vst.msk [vmem:[%s286] sm:$0xff] %vm1312, %v1154
        %1314 = vst.msk [vmem:[%s286 + $0x8] sm:$0xff] %vm1312, %v1159
        %1315 = vst.msk [vmem:[%s286 + $0x10] sm:$0xff] %vm1312, %v1164
        %1316 = vst.msk [vmem:[%s286 + $0x18] sm:$0xff] %vm1312, %v1169
        %1317 = vst.msk [vmem:[%s286 + $0x20] sm:$0xff] %vm1312, %v1174
        %1318 = vst.msk [vmem:[%s286 + $0x28] sm:$0xff] %vm1312, %v1179
        %1319 = vst.msk [vmem:[%s286 + $0x30] sm:$0xff] %vm1312, %v1184
        %1320 = vst.msk [vmem:[%s286 + $0x38] sm:$0xff] %vm1312, %v1189
        %1321 = vst.msk [vmem:[%s286 + $0x40] sm:$0xff] %vm1312, %v1194
        %1322 = vst.msk [vmem:[%s286 + $0x48] sm:$0xff] %vm1312, %v1199
        %1323 = vst.msk [vmem:[%s286 + $0x50] sm:$0xff] %vm1312, %v1204
        %1324 = vst.msk [vmem:[%s286 + $0x58] sm:$0xff] %vm1312, %v1209
        %1325 = vst.msk [vmem:[%s286 + $0x60] sm:$0xff] %vm1312, %v1214
        %1326 = vst.msk [vmem:[%s286 + $0x68] sm:$0xff] %vm1312, %v1219
        %1327 = vst.msk [vmem:[%s286 + $0x70] sm:$0xff] %vm1312, %v1224
        %1328 = vst.msk [vmem:[%s286 + $0x78] sm:$0xff] %vm1312, %v1229
        %1329 = vst.msk [vmem:[%s286 + $0x80] sm:$0xff] %vm1312, %v1234
        %1330 = vst.msk [vmem:[%s286 + $0x88] sm:$0xff] %vm1312, %v1239
        %1331 = vst.msk [vmem:[%s286 + $0x90] sm:$0xff] %vm1312, %v1244
        %1332 = vst.msk [vmem:[%s286 + $0x98] sm:$0xff] %vm1312, %v1249
        %1333 = vst.msk [vmem:[%s286 + $0xa0] sm:$0xff] %vm1312, %v1254
        %1334 = vst.msk [vmem:[%s286 + $0xa8] sm:$0xff] %vm1312, %v1259
        %1335 = vst.msk [vmem:[%s286 + $0xb0] sm:$0xff] %vm1312, %v1264
        %1336 = vst.msk [vmem:[%s286 + $0xb8] sm:$0xff] %vm1312, %v1269
        %1337 = vst.msk [vmem:[%s286 + $0xc0] sm:$0xff] %vm1312, %v1274
        %1338 = vst.msk [vmem:[%s286 + $0xc8] sm:$0xff] %vm1312, %v1279
        %1339 = vst.msk [vmem:[%s286 + $0xd0] sm:$0xff] %vm1312, %v1284
        %1340 = vst.msk [vmem:[%s286 + $0xd8] sm:$0xff] %vm1312, %v1289
        %1341 = vst.msk [vmem:[%s286 + $0xe0] sm:$0xff] %vm1312, %v1294
        %1342 = vst.msk [vmem:[%s286 + $0xe8] sm:$0xff] %vm1312, %v1299
        %1343 = vst.msk [vmem:[%s286 + $0xf0] sm:$0xff] %vm1312, %v1304
        %1344 = vst.msk [vmem:[%s286 + $0xf8] sm:$0xff] %vm1312, %v1309
        %s1345 = sand.u32 %s121, 1
        %s1346 = scalar_lea.sflag [#allocation5], %s1345
        %s1347 = sand.u32 %s121, 1
        %s1348 = smul.addr %s1347, 512
        %s1349 = scalar_lea.vmem [#allocation4], %s1348
        %s1350 = smul.u32 32, %s24
        %p1351 = scmp.lt.s32.totalorder %s23, 1
        %s1352 = scalar_select %p1351, %s23, 1
        %p1353 = scmp.lt.s32.totalorder %s1350, 31
        %s1354 = scalar_select %p1353, %s1350, 31
        %s1355 = smul.addr %s1352, 32
        %s1356 = sadd.s32 %s1354, %s1355
        %s1357 = smul.addr %s1356, 8
        %s1358 = scalar_lea.vmem %s4, %s1357
        // Predicated region
        $region37: #{transformer_forward.1} parent=31 // pred_check
          %p1359 = pneg %p131
        $region38: #{transformer_forward.1} parent=31 // pred_check_branch
          %1361 = sbr.rel (%p1359) target = $region40
        $region39: #{transformer_forward.1} parent=31 // pred_region
          %s1362 = smul.u32 32, %s24
          %s1364 = ssub.s32 8192, 8192
          %1365 = vsyncadd %s1346, %s1364
          %s1366 = smul.addr %s1362, 2
          %s1367 = smul.addr %s23, 64
          %s1368 = sadd.s32 %s1366, %s1367
          %s1369 = smul.addr %s1368, 128
          %s1370 = scalar_lea.hbm %s3, %s1369
          %s1371 = sshll.u32 %s1349, 4
          %s1372 = int_to_ptr.vmem [resolvable:$true] %s1371
          %1377 = dma.vmem_to_hbm [thread:$0]  %s1372, 8192, %s1370, %s1346, 256, 256, 16
        $region40: #{transformer_forward.1} parent=31 // pred_fallthru
          _
        // Predicated region
        $region41: #{transformer_forward.1} parent=31 // pred_check
          %p1378 = pneg %p159
        $region42: #{transformer_forward.1} parent=31 // pred_check_branch
          %1380 = sbr.rel (%p1378) target = $region44
        $region43: #{transformer_forward.1} parent=31 // pred_region
          %s1381 = smul.u32 32, %s24
        $region44: #{transformer_forward.1} parent=31 // pred_fallthru
          _
      $region32: #{transformer_forward.1} parent=5 // pred_fallthru
        _
      %p1382 = scmp.le.s32.totalorder 2, %s14
      // Predicated region
      $region45: #{transformer_forward.1} parent=5 // pred_check
        %p1383 = pneg %p1382
      $region46: #{transformer_forward.1} parent=5 // pred_check_branch
        %1385 = sbr.rel (%p1383) target = $region48
      $region47: #{transformer_forward.1} parent=5 // pred_region
        %s1386 = ssub.s32 %s14, 2
        // Predicated region
        $region49: #{transformer_forward.1} parent=47 // pred_check
          %p1387 = pneg %p137
        $region50: #{transformer_forward.1} parent=47 // pred_check_branch
          %1389 = sbr.rel (%p1387) target = $region52
        $region51: #{transformer_forward.1} parent=47 // pred_region
          %s1390 = sand.u32 %s122, 1
          %s1391 = scalar_lea.sflag [#allocation5], %s1390
          %s1392 = sand.u32 %s122, 1
          %s1393 = smul.addr %s1392, 512
          %s1394 = scalar_lea.vmem [#allocation4], %s1393
          %1395 = dma.done %s1391, 8192
        $region52: #{transformer_forward.1} parent=47 // pred_fallthru
          _
        // Predicated region
        $region53: #{transformer_forward.1} parent=47 // pred_check
          %p1396 = pneg %p165
        $region54: #{transformer_forward.1} parent=47 // pred_check_branch
          %1398 = sbr.rel (%p1396) target = $region56
        $region55: #{transformer_forward.1} parent=47 // pred_region
          %s1399 = smul.u32 32, %s26
          %p1400 = scmp.lt.s32.totalorder %s25, 1
          %s1401 = scalar_select %p1400, %s25, 1
          %p1402 = scmp.lt.s32.totalorder %s1399, 31
          %s1403 = scalar_select %p1402, %s1399, 31
          %s1404 = smul.addr %s1401, 32
          %s1405 = sadd.s32 %s1403, %s1404
          %s1406 = smul.addr %s1405, 8
          %s1407 = scalar_lea.vmem %s4, %s1406
        $region56: #{transformer_forward.1} parent=47 // pred_fallthru
          _
      $region48: #{transformer_forward.1} parent=5 // pred_fallthru
        _
    $region6: #{transformer_forward.1} parent=1 // loop_footer
      %s18 = sadd.s32 1, %s14
    $region7: #{transformer_forward.1} parent=1 // loop_footer_branch
      %13 = sbr.rel target = $region3
    $region8: #{transformer_forward.1} parent=1 // loop_exit
      _
    %1408 = vsyncpa [#allocation5], 1
    %s1409 = scalar_lea.sflag [#allocation5], 1
    %1410 = vsyncpa %s1409, 1

</llo_original>
